<compile_context>
chip_gen: v5e
topology: v5e:2x2
jax: 0.10.0
libtpu: 0.0.40
codegen_flags: <defaults>
</compile_context>

<pallas_src>
import jax
import jax.numpy as jnp
from jax.experimental import pallas as pl
from jax.experimental.pallas import tpu as pltpu


def lstm_argmax_kernel(tok_ref, gate_table_ref, w_hh_ref, w_d_ref, b_d_ref,
                       labels_ref):
    """LSTM recurrence + dense + argmax, single block.

    tok_ref        : (S, B)      int32 SMEM  token ids (scalar-prefetched)
    gate_table_ref : (V, 1, 4H)  f32  VMEM   emb@W_ih + (b_ih+b_hh), gate order (i,f,o,g)
    w_hh_ref       : (H, 4H)     bf16 VMEM   hidden->gates weights, same order
    w_d_ref        : (H, O)      bf16 VMEM   dense weights
    b_d_ref        : (1, O)      f32  VMEM   dense bias
    labels_ref     : (B, 1)      int32 VMEM  argmax(dense(h_last))
    """
    S, B = tok_ref.shape
    V, _, four_h = gate_table_ref.shape
    H = four_h // 4
    O = w_d_ref.shape[1]

    # Hoist the recurrent weight load out of the loop.
    w_hh = w_hh_ref[...]                                   # (H, 4H) bf16

    # LSTM state lives in registers (loop-carried values), not VMEM.
    h = jnp.zeros((B, H), jnp.float32)
    c = jnp.zeros((B, H), jnp.float32)

    # Static unroll over the short, fixed-length sequence (S known at trace time).
    for t in range(S):
        # In-kernel fused embedding + input projection: gather one gate_table
        # row per (t, b) via dynamic leading-dim indexing from VMEM.
        gx_t = jnp.concatenate(
            [gate_table_ref[tok_ref[t, b]] for b in range(B)], axis=0)  # (B, 4H) f32

        gates = gx_t + jnp.dot(h.astype(jnp.bfloat16), w_hh,
                               preferred_element_type=jnp.float32)      # (B, 4H)
        sig = jax.nn.sigmoid(gates[:, : 3 * H])     # (i, f, o) in one 3H-lane slab
        g_g = jnp.tanh(gates[:, 3 * H:])            # g in the trailing H lanes
        i_g = sig[:, 0 * H:1 * H]
        f_g = sig[:, 1 * H:2 * H]
        o_g = sig[:, 2 * H:3 * H]
        c = f_g * c + i_g * g_g
        h = o_g * jnp.tanh(c)

    # Dense on the last hidden state; softmax dropped (argmax-invariant).
    logits = (jnp.dot(h.astype(jnp.bfloat16), w_d_ref[...],
                      preferred_element_type=jnp.float32)
              + b_d_ref[...])                                           # (B, O)

    # First-max-index argmax (matches jnp.argmax tie-breaking), written as int32.
    col = jax.lax.broadcasted_iota(jnp.int32, logits.shape, 1)
    row_max = jnp.max(logits, axis=-1, keepdims=True)
    labels = jnp.min(jnp.where(logits == row_max, col, jnp.int32(O)),
                     axis=-1, keepdims=True)                            # (B, 1)
    labels_ref[...] = labels


def _to_kernel_gate_order(w, H):
    """Reorder last axis from PyTorch LSTM gate order (i, f, g, o) to (i, f, o, g)."""
    return jnp.concatenate(
        [w[..., 0:2 * H], w[..., 3 * H:4 * H], w[..., 2 * H:3 * H]], axis=-1)


def prepare_params(params):
    """One-time parameter-load-time preprocessing (hoisted out of the call path).

    Fuses embedding + input projection + both biases into gate_table and
    pre-reorders / pre-casts all kernel operands.
    """
    H = params["w_hh"].shape[0]
    w_ih_k = _to_kernel_gate_order(params["w_ih"], H)
    b_k = _to_kernel_gate_order(params["b"], H)
    # Padding row 0 (zero embedding) correctly yields just the bias, matching
    # the LSTM's behaviour for x = 0.
    gate_table = (jnp.dot(params["embedding"].astype(jnp.float32),
                          w_ih_k.astype(jnp.float32)) + b_k)            # (V, 4H)
    V, four_h = gate_table.shape
    return {
        "gate_table": gate_table.reshape(V, 1, four_h).astype(jnp.float32),
        "w_hh": _to_kernel_gate_order(params["w_hh"], H).astype(jnp.bfloat16),
        "w_dense": params["w_dense"].astype(jnp.bfloat16),
        "b_dense": params["b_dense"].astype(jnp.float32),
    }


@jax.jit
def simple_lstm_forward(x_tokens, prep):
    """x_tokens: (seq_len, batch) int32. Returns predicted_labels (batch,) int32."""
    S, B = x_tokens.shape
    V, _, four_h = prep["gate_table"].shape
    H = four_h // 4
    O = prep["w_dense"].shape[1]

    labels = pl.pallas_call(
        lstm_argmax_kernel,
        out_shape=jax.ShapeDtypeStruct((B, 1), jnp.int32),
        grid_spec=pltpu.PrefetchScalarGridSpec(
            num_scalar_prefetch=1,                 # tokens -> SMEM
            grid=(1,),                             # single block; nothing to pipeline
            in_specs=[
                pl.BlockSpec((V, 1, four_h), lambda i, tok: (0, 0, 0)),
                pl.BlockSpec((H, four_h), lambda i, tok: (0, 0)),
                pl.BlockSpec((H, O), lambda i, tok: (0, 0)),
                pl.BlockSpec((1, O), lambda i, tok: (0, 0)),
            ],
            out_specs=pl.BlockSpec((B, 1), lambda i, tok: (0, 0)),
        ),
        compiler_params=pltpu.CompilerParams(
            dimension_semantics=("arbitrary",)),
    )(x_tokens.astype(jnp.int32), prep["gate_table"], prep["w_hh"],
      prep["w_dense"], prep["b_dense"])

    return labels[:, 0]


def init_params(key, vocab_size, emb_size, hidden_size, out_size):
    ks = jax.random.split(key, 7)
    scale = 0.1
    embedding = scale * jax.random.normal(ks[0], (vocab_size, emb_size), jnp.float32)
    embedding = embedding.at[0].set(0.0)                     # padding_idx=0
    w_ih = scale * jax.random.normal(ks[1], (emb_size, 4 * hidden_size), jnp.float32)
    w_hh = scale * jax.random.normal(ks[2], (hidden_size, 4 * hidden_size), jnp.float32)
    b_ih = scale * jax.random.normal(ks[3], (1, 4 * hidden_size), jnp.float32)
    b_hh = scale * jax.random.normal(ks[4], (1, 4 * hidden_size), jnp.float32)
    w_dense = scale * jax.random.normal(ks[5], (hidden_size, out_size), jnp.float32)
    b_dense = scale * jax.random.normal(ks[6], (1, out_size), jnp.float32)
    return {
        "embedding": embedding,
        "w_ih": w_ih,                    # PyTorch gate order (i, f, g, o)
        "w_hh": w_hh,
        "b": b_ih + b_hh,                # the two PyTorch biases fold into one
        "w_dense": w_dense,
        "b_dense": b_dense,
    }


def reference_logits_f32(x_tokens, params):
    """Pure-JAX f32 reference in the original PyTorch layout (no fusion/reorder)."""
    emb = params["embedding"]
    w_ih, w_hh, b = params["w_ih"], params["w_hh"], params["b"]
    H = w_hh.shape[0]
    x = emb[x_tokens]                                        # (S, B, E)
    S, B, _ = x.shape
    h = jnp.zeros((B, H), jnp.float32)
    c = jnp.zeros((B, H), jnp.float32)
    for t in range(S):
        gates = x[t] @ w_ih + h @ w_hh + b                   # order (i, f, g, o)
        i_g = jax.nn.sigmoid(gates[:, 0 * H:1 * H])
        f_g = jax.nn.sigmoid(gates[:, 1 * H:2 * H])
        g_g = jnp.tanh(gates[:, 2 * H:3 * H])
        o_g = jax.nn.sigmoid(gates[:, 3 * H:4 * H])
        c = f_g * c + i_g * g_g
        h = o_g * jnp.tanh(c)
    return h @ params["w_dense"] + params["b_dense"]         # (B, O)


if __name__ == "__main__":
    # Small shapes consistent with the module's forward; batch=8 fills the
    # f32 sublane dimension (perf review #5).
    SEQ_LEN, BATCH = 8, 8
    VOCAB, EMB, HIDDEN, OUT = 64, 16, 32, 4

    key = jax.random.PRNGKey(0)
    k_params, k_tokens = jax.random.split(key)

    params = init_params(k_params, VOCAB, EMB, HIDDEN, OUT)
    prep = prepare_params(params)        # hoisted, param-load-time work

    # tokens: (seq_len, batch) int32 in [0, VOCAB)
    x = jax.random.randint(k_tokens, (SEQ_LEN, BATCH), 0, VOCAB, dtype=jnp.int32)

    preds = simple_lstm_forward(x, prep)
    preds = jax.block_until_ready(preds)
    assert preds.shape == (BATCH,) and preds.dtype == jnp.int32

    # Correctness check vs. the f32 reference; label mismatches are tolerated
    # only where the top-2 reference logits nearly tie (bf16 MXU operands can
    # only flip argmax on near-ties).
    ref_logits = reference_logits_f32(x, params)
    ref_labels = jnp.argmax(ref_logits, axis=-1).astype(jnp.int32)
    mismatch = preds != ref_labels
    if bool(jnp.any(mismatch)):
        srt = jnp.sort(ref_logits, axis=-1)
        gap = srt[:, -1] - srt[:, -2]
        assert bool(jnp.all(jnp.where(mismatch, gap < 1e-2, True))), \
            "kernel labels disagree with reference on non-tied rows"

    print("KERNEL_OK")
</pallas_src>

<mosaic_0001>
module attributes {stable_mosaic.version = 11 : i64} {
  func.func @lstm_argmax_kernel(%arg0: i32, %arg1: memref<8x8xi32, #tpu.memory_space<smem>>, %arg2: memref<64x1x128xf32, #tpu.memory_space<vmem>>, %arg3: memref<32x128xbf16, #tpu.memory_space<vmem>>, %arg4: memref<32x4xbf16, #tpu.memory_space<vmem>>, %arg5: memref<1x4xf32, #tpu.memory_space<vmem>>, %arg6: memref<8x1xi32, #tpu.memory_space<vmem>>) attributes {dimension_semantics = [#tpu.dimension_semantics<arbitrary>], iteration_bounds = array<i64: 1>, scalar_prefetch = 1 : i64, scratch_operands = 0 : i64, tpu.core_type = #tpu.core_type<tc>, window_params = [{pipeline_mode = #tpu.pipeline_mode<synchronous>, transform_indices = @transform_0, window_bounds = array<i64: 64, 1, 128>}, {pipeline_mode = #tpu.pipeline_mode<synchronous>, transform_indices = @transform_1, window_bounds = array<i64: 32, 128>}, {pipeline_mode = #tpu.pipeline_mode<synchronous>, transform_indices = @transform_2, window_bounds = array<i64: 32, 4>}, {pipeline_mode = #tpu.pipeline_mode<synchronous>, transform_indices = @transform_3, window_bounds = array<i64: 1, 4>}, {pipeline_mode = #tpu.pipeline_mode<synchronous>, transform_indices = @transform_4, window_bounds = array<i64: 8, 1>}]} {
    %c0 = arith.constant 0 : index
    %c0_0 = arith.constant 0 : index
    %0 = vector.load %arg3[%c0, %c0_0] : memref<32x128xbf16, #tpu.memory_space<vmem>>, vector<32x128xbf16>
    %cst = arith.constant 0.000000e+00 : f32
    %1 = vector.broadcast %cst : f32 to vector<8x32xf32>
    %cst_1 = arith.constant 0.000000e+00 : f32
    %2 = vector.broadcast %cst_1 : f32 to vector<8x32xf32>
    %c0_2 = arith.constant 0 : index
    %c0_3 = arith.constant 0 : index
    %3 = memref.load %arg1[%c0_2, %c0_3] : memref<8x8xi32, #tpu.memory_space<smem>>
    %4 = arith.index_cast %3 : i32 to index
    %c0_4 = arith.constant 0 : index
    %c0_5 = arith.constant 0 : index
    %5 = vector.load %arg2[%4, %c0_4, %c0_5] : memref<64x1x128xf32, #tpu.memory_space<vmem>>, vector<1x1x128xf32>
    %6 = vector.shape_cast %5 : vector<1x1x128xf32> to vector<1x128xf32>
    %c0_6 = arith.constant 0 : index
    %c1 = arith.constant 1 : index
    %7 = memref.load %arg1[%c0_6, %c1] : memref<8x8xi32, #tpu.memory_space<smem>>
    %8 = arith.index_cast %7 : i32 to index
    %c0_7 = arith.constant 0 : index
    %c0_8 = arith.constant 0 : index
    %9 = vector.load %arg2[%8, %c0_7, %c0_8] : memref<64x1x128xf32, #tpu.memory_space<vmem>>, vector<1x1x128xf32>
    %10 = vector.shape_cast %9 : vector<1x1x128xf32> to vector<1x128xf32>
    %c0_9 = arith.constant 0 : index
    %c2 = arith.constant 2 : index
    %11 = memref.load %arg1[%c0_9, %c2] : memref<8x8xi32, #tpu.memory_space<smem>>
    %12 = arith.index_cast %11 : i32 to index
    %c0_10 = arith.constant 0 : index
    %c0_11 = arith.constant 0 : index
    %13 = vector.load %arg2[%12, %c0_10, %c0_11] : memref<64x1x128xf32, #tpu.memory_space<vmem>>, vector<1x1x128xf32>
    %14 = vector.shape_cast %13 : vector<1x1x128xf32> to vector<1x128xf32>
    %c0_12 = arith.constant 0 : index
    %c3 = arith.constant 3 : index
    %15 = memref.load %arg1[%c0_12, %c3] : memref<8x8xi32, #tpu.memory_space<smem>>
    %16 = arith.index_cast %15 : i32 to index
    %c0_13 = arith.constant 0 : index
    %c0_14 = arith.constant 0 : index
    %17 = vector.load %arg2[%16, %c0_13, %c0_14] : memref<64x1x128xf32, #tpu.memory_space<vmem>>, vector<1x1x128xf32>
    %18 = vector.shape_cast %17 : vector<1x1x128xf32> to vector<1x128xf32>
    %c0_15 = arith.constant 0 : index
    %c4 = arith.constant 4 : index
    %19 = memref.load %arg1[%c0_15, %c4] : memref<8x8xi32, #tpu.memory_space<smem>>
    %20 = arith.index_cast %19 : i32 to index
    %c0_16 = arith.constant 0 : index
    %c0_17 = arith.constant 0 : index
    %21 = vector.load %arg2[%20, %c0_16, %c0_17] : memref<64x1x128xf32, #tpu.memory_space<vmem>>, vector<1x1x128xf32>
    %22 = vector.shape_cast %21 : vector<1x1x128xf32> to vector<1x128xf32>
    %c0_18 = arith.constant 0 : index
    %c5 = arith.constant 5 : index
    %23 = memref.load %arg1[%c0_18, %c5] : memref<8x8xi32, #tpu.memory_space<smem>>
    %24 = arith.index_cast %23 : i32 to index
    %c0_19 = arith.constant 0 : index
    %c0_20 = arith.constant 0 : index
    %25 = vector.load %arg2[%24, %c0_19, %c0_20] : memref<64x1x128xf32, #tpu.memory_space<vmem>>, vector<1x1x128xf32>
    %26 = vector.shape_cast %25 : vector<1x1x128xf32> to vector<1x128xf32>
    %c0_21 = arith.constant 0 : index
    %c6 = arith.constant 6 : index
    %27 = memref.load %arg1[%c0_21, %c6] : memref<8x8xi32, #tpu.memory_space<smem>>
    %28 = arith.index_cast %27 : i32 to index
    %c0_22 = arith.constant 0 : index
    %c0_23 = arith.constant 0 : index
    %29 = vector.load %arg2[%28, %c0_22, %c0_23] : memref<64x1x128xf32, #tpu.memory_space<vmem>>, vector<1x1x128xf32>
    %30 = vector.shape_cast %29 : vector<1x1x128xf32> to vector<1x128xf32>
    %c0_24 = arith.constant 0 : index
    %c7 = arith.constant 7 : index
    %31 = memref.load %arg1[%c0_24, %c7] : memref<8x8xi32, #tpu.memory_space<smem>>
    %32 = arith.index_cast %31 : i32 to index
    %c0_25 = arith.constant 0 : index
    %c0_26 = arith.constant 0 : index
    %33 = vector.load %arg2[%32, %c0_25, %c0_26] : memref<64x1x128xf32, #tpu.memory_space<vmem>>, vector<1x1x128xf32>
    %34 = vector.shape_cast %33 : vector<1x1x128xf32> to vector<1x128xf32>
    %35 = tpu.concatenate %6, %10, %14, %18, %22, %26, %30, %34 in 0 : vector<1x128xf32>, vector<1x128xf32>, vector<1x128xf32>, vector<1x128xf32>, vector<1x128xf32>, vector<1x128xf32>, vector<1x128xf32>, vector<1x128xf32> -> vector<8x128xf32>
    %36 = arith.truncf %1 : vector<8x32xf32> to vector<8x32xbf16>
    %cst_27 = arith.constant dense<0.000000e+00> : vector<8x128xf32>
    %37 = tpu.matmul %36, %0, %cst_27 {dimension_numbers = #tpu.dot_dimension_numbers<[1], [0], [0], [1], [0, 0, 1, 1], [], []>} : vector<8x32xbf16>, vector<32x128xbf16>, vector<8x128xf32> -> vector<8x128xf32>
    %38 = arith.addf %35, %37 : vector<8x128xf32>
    %39 = vector.extract_strided_slice %38 {offsets = [0, 0], sizes = [8, 96], strides = [1, 1]} : vector<8x128xf32> to vector<8x96xf32>
    %40 = arith.negf %39 : vector<8x96xf32>
    %41 = math.exp %40 : vector<8x96xf32>
    %cst_28 = arith.constant 1.000000e+00 : f32
    %42 = vector.broadcast %cst_28 : f32 to vector<8x96xf32>
    %43 = arith.addf %42, %41 : vector<8x96xf32>
    %44 = arith.divf %42, %43 : vector<8x96xf32>
    %45 = vector.extract_strided_slice %38 {offsets = [0, 96], sizes = [8, 32], strides = [1, 1]} : vector<8x128xf32> to vector<8x32xf32>
    %46 = math.tanh %45 : vector<8x32xf32>
    %47 = vector.extract_strided_slice %44 {offsets = [0, 0], sizes = [8, 32], strides = [1, 1]} : vector<8x96xf32> to vector<8x32xf32>
    %48 = vector.extract_strided_slice %44 {offsets = [0, 32], sizes = [8, 32], strides = [1, 1]} : vector<8x96xf32> to vector<8x32xf32>
    %49 = vector.extract_strided_slice %44 {offsets = [0, 64], sizes = [8, 32], strides = [1, 1]} : vector<8x96xf32> to vector<8x32xf32>
    %50 = arith.mulf %48, %2 : vector<8x32xf32>
    %51 = arith.mulf %47, %46 : vector<8x32xf32>
    %52 = arith.addf %50, %51 : vector<8x32xf32>
    %53 = math.tanh %52 : vector<8x32xf32>
    %54 = arith.mulf %49, %53 : vector<8x32xf32>
    %c1_29 = arith.constant 1 : index
    %c0_30 = arith.constant 0 : index
    %55 = memref.load %arg1[%c1_29, %c0_30] : memref<8x8xi32, #tpu.memory_space<smem>>
    %56 = arith.index_cast %55 : i32 to index
    %c0_31 = arith.constant 0 : index
    %c0_32 = arith.constant 0 : index
    %57 = vector.load %arg2[%56, %c0_31, %c0_32] : memref<64x1x128xf32, #tpu.memory_space<vmem>>, vector<1x1x128xf32>
    %58 = vector.shape_cast %57 : vector<1x1x128xf32> to vector<1x128xf32>
    %c1_33 = arith.constant 1 : index
    %c1_34 = arith.constant 1 : index
    %59 = memref.load %arg1[%c1_33, %c1_34] : memref<8x8xi32, #tpu.memory_space<smem>>
    %60 = arith.index_cast %59 : i32 to index
    %c0_35 = arith.constant 0 : index
    %c0_36 = arith.constant 0 : index
    %61 = vector.load %arg2[%60, %c0_35, %c0_36] : memref<64x1x128xf32, #tpu.memory_space<vmem>>, vector<1x1x128xf32>
    %62 = vector.shape_cast %61 : vector<1x1x128xf32> to vector<1x128xf32>
    %c1_37 = arith.constant 1 : index
    %c2_38 = arith.constant 2 : index
    %63 = memref.load %arg1[%c1_37, %c2_38] : memref<8x8xi32, #tpu.memory_space<smem>>
    %64 = arith.index_cast %63 : i32 to index
    %c0_39 = arith.constant 0 : index
    %c0_40 = arith.constant 0 : index
    %65 = vector.load %arg2[%64, %c0_39, %c0_40] : memref<64x1x128xf32, #tpu.memory_space<vmem>>, vector<1x1x128xf32>
    %66 = vector.shape_cast %65 : vector<1x1x128xf32> to vector<1x128xf32>
    %c1_41 = arith.constant 1 : index
    %c3_42 = arith.constant 3 : index
    %67 = memref.load %arg1[%c1_41, %c3_42] : memref<8x8xi32, #tpu.memory_space<smem>>
    %68 = arith.index_cast %67 : i32 to index
    %c0_43 = arith.constant 0 : index
    %c0_44 = arith.constant 0 : index
    %69 = vector.load %arg2[%68, %c0_43, %c0_44] : memref<64x1x128xf32, #tpu.memory_space<vmem>>, vector<1x1x128xf32>
    %70 = vector.shape_cast %69 : vector<1x1x128xf32> to vector<1x128xf32>
    %c1_45 = arith.constant 1 : index
    %c4_46 = arith.constant 4 : index
    %71 = memref.load %arg1[%c1_45, %c4_46] : memref<8x8xi32, #tpu.memory_space<smem>>
    %72 = arith.index_cast %71 : i32 to index
    %c0_47 = arith.constant 0 : index
    %c0_48 = arith.constant 0 : index
    %73 = vector.load %arg2[%72, %c0_47, %c0_48] : memref<64x1x128xf32, #tpu.memory_space<vmem>>, vector<1x1x128xf32>
    %74 = vector.shape_cast %73 : vector<1x1x128xf32> to vector<1x128xf32>
    %c1_49 = arith.constant 1 : index
    %c5_50 = arith.constant 5 : index
    %75 = memref.load %arg1[%c1_49, %c5_50] : memref<8x8xi32, #tpu.memory_space<smem>>
    %76 = arith.index_cast %75 : i32 to index
    %c0_51 = arith.constant 0 : index
    %c0_52 = arith.constant 0 : index
    %77 = vector.load %arg2[%76, %c0_51, %c0_52] : memref<64x1x128xf32, #tpu.memory_space<vmem>>, vector<1x1x128xf32>
    %78 = vector.shape_cast %77 : vector<1x1x128xf32> to vector<1x128xf32>
    %c1_53 = arith.constant 1 : index
    %c6_54 = arith.constant 6 : index
    %79 = memref.load %arg1[%c1_53, %c6_54] : memref<8x8xi32, #tpu.memory_space<smem>>
    %80 = arith.index_cast %79 : i32 to index
    %c0_55 = arith.constant 0 : index
    %c0_56 = arith.constant 0 : index
    %81 = vector.load %arg2[%80, %c0_55, %c0_56] : memref<64x1x128xf32, #tpu.memory_space<vmem>>, vector<1x1x128xf32>
    %82 = vector.shape_cast %81 : vector<1x1x128xf32> to vector<1x128xf32>
    %c1_57 = arith.constant 1 : index
    %c7_58 = arith.constant 7 : index
    %83 = memref.load %arg1[%c1_57, %c7_58] : memref<8x8xi32, #tpu.memory_space<smem>>
    %84 = arith.index_cast %83 : i32 to index
    %c0_59 = arith.constant 0 : index
    %c0_60 = arith.constant 0 : index
    %85 = vector.load %arg2[%84, %c0_59, %c0_60] : memref<64x1x128xf32, #tpu.memory_space<vmem>>, vector<1x1x128xf32>
    %86 = vector.shape_cast %85 : vector<1x1x128xf32> to vector<1x128xf32>
    %87 = tpu.concatenate %58, %62, %66, %70, %74, %78, %82, %86 in 0 : vector<1x128xf32>, vector<1x128xf32>, vector<1x128xf32>, vector<1x128xf32>, vector<1x128xf32>, vector<1x128xf32>, vector<1x128xf32>, vector<1x128xf32> -> vector<8x128xf32>
    %88 = arith.truncf %54 : vector<8x32xf32> to vector<8x32xbf16>
    %cst_61 = arith.constant dense<0.000000e+00> : vector<8x128xf32>
    %89 = tpu.matmul %88, %0, %cst_61 {dimension_numbers = #tpu.dot_dimension_numbers<[1], [0], [0], [1], [0, 0, 1, 1], [], []>} : vector<8x32xbf16>, vector<32x128xbf16>, vector<8x128xf32> -> vector<8x128xf32>
    %90 = arith.addf %87, %89 : vector<8x128xf32>
    %91 = vector.extract_strided_slice %90 {offsets = [0, 0], sizes = [8, 96], strides = [1, 1]} : vector<8x128xf32> to vector<8x96xf32>
    %92 = arith.negf %91 : vector<8x96xf32>
    %93 = math.exp %92 : vector<8x96xf32>
    %cst_62 = arith.constant 1.000000e+00 : f32
    %94 = vector.broadcast %cst_62 : f32 to vector<8x96xf32>
    %95 = arith.addf %94, %93 : vector<8x96xf32>
    %96 = arith.divf %94, %95 : vector<8x96xf32>
    %97 = vector.extract_strided_slice %90 {offsets = [0, 96], sizes = [8, 32], strides = [1, 1]} : vector<8x128xf32> to vector<8x32xf32>
    %98 = math.tanh %97 : vector<8x32xf32>
    %99 = vector.extract_strided_slice %96 {offsets = [0, 0], sizes = [8, 32], strides = [1, 1]} : vector<8x96xf32> to vector<8x32xf32>
    %100 = vector.extract_strided_slice %96 {offsets = [0, 32], sizes = [8, 32], strides = [1, 1]} : vector<8x96xf32> to vector<8x32xf32>
    %101 = vector.extract_strided_slice %96 {offsets = [0, 64], sizes = [8, 32], strides = [1, 1]} : vector<8x96xf32> to vector<8x32xf32>
    %102 = arith.mulf %100, %52 : vector<8x32xf32>
    %103 = arith.mulf %99, %98 : vector<8x32xf32>
    %104 = arith.addf %102, %103 : vector<8x32xf32>
    %105 = math.tanh %104 : vector<8x32xf32>
    %106 = arith.mulf %101, %105 : vector<8x32xf32>
    %c2_63 = arith.constant 2 : index
    %c0_64 = arith.constant 0 : index
    %107 = memref.load %arg1[%c2_63, %c0_64] : memref<8x8xi32, #tpu.memory_space<smem>>
    %108 = arith.index_cast %107 : i32 to index
    %c0_65 = arith.constant 0 : index
    %c0_66 = arith.constant 0 : index
    %109 = vector.load %arg2[%108, %c0_65, %c0_66] : memref<64x1x128xf32, #tpu.memory_space<vmem>>, vector<1x1x128xf32>
    %110 = vector.shape_cast %109 : vector<1x1x128xf32> to vector<1x128xf32>
    %c2_67 = arith.constant 2 : index
    %c1_68 = arith.constant 1 : index
    %111 = memref.load %arg1[%c2_67, %c1_68] : memref<8x8xi32, #tpu.memory_space<smem>>
    %112 = arith.index_cast %111 : i32 to index
    %c0_69 = arith.constant 0 : index
    %c0_70 = arith.constant 0 : index
    %113 = vector.load %arg2[%112, %c0_69, %c0_70] : memref<64x1x128xf32, #tpu.memory_space<vmem>>, vector<1x1x128xf32>
    %114 = vector.shape_cast %113 : vector<1x1x128xf32> to vector<1x128xf32>
    %c2_71 = arith.constant 2 : index
    %c2_72 = arith.constant 2 : index
    %115 = memref.load %arg1[%c2_71, %c2_72] : memref<8x8xi32, #tpu.memory_space<smem>>
    %116 = arith.index_cast %115 : i32 to index
    %c0_73 = arith.constant 0 : index
    %c0_74 = arith.constant 0 : index
    %117 = vector.load %arg2[%116, %c0_73, %c0_74] : memref<64x1x128xf32, #tpu.memory_space<vmem>>, vector<1x1x128xf32>
    %118 = vector.shape_cast %117 : vector<1x1x128xf32> to vector<1x128xf32>
    %c2_75 = arith.constant 2 : index
    %c3_76 = arith.constant 3 : index
    %119 = memref.load %arg1[%c2_75, %c3_76] : memref<8x8xi32, #tpu.memory_space<smem>>
    %120 = arith.index_cast %119 : i32 to index
    %c0_77 = arith.constant 0 : index
    %c0_78 = arith.constant 0 : index
    %121 = vector.load %arg2[%120, %c0_77, %c0_78] : memref<64x1x128xf32, #tpu.memory_space<vmem>>, vector<1x1x128xf32>
    %122 = vector.shape_cast %121 : vector<1x1x128xf32> to vector<1x128xf32>
    %c2_79 = arith.constant 2 : index
    %c4_80 = arith.constant 4 : index
    %123 = memref.load %arg1[%c2_79, %c4_80] : memref<8x8xi32, #tpu.memory_space<smem>>
    %124 = arith.index_cast %123 : i32 to index
    %c0_81 = arith.constant 0 : index
    %c0_82 = arith.constant 0 : index
    %125 = vector.load %arg2[%124, %c0_81, %c0_82] : memref<64x1x128xf32, #tpu.memory_space<vmem>>, vector<1x1x128xf32>
    %126 = vector.shape_cast %125 : vector<1x1x128xf32> to vector<1x128xf32>
    %c2_83 = arith.constant 2 : index
    %c5_84 = arith.constant 5 : index
    %127 = memref.load %arg1[%c2_83, %c5_84] : memref<8x8xi32, #tpu.memory_space<smem>>
    %128 = arith.index_cast %127 : i32 to index
    %c0_85 = arith.constant 0 : index
    %c0_86 = arith.constant 0 : index
    %129 = vector.load %arg2[%128, %c0_85, %c0_86] : memref<64x1x128xf32, #tpu.memory_space<vmem>>, vector<1x1x128xf32>
    %130 = vector.shape_cast %129 : vector<1x1x128xf32> to vector<1x128xf32>
    %c2_87 = arith.constant 2 : index
    %c6_88 = arith.constant 6 : index
    %131 = memref.load %arg1[%c2_87, %c6_88] : memref<8x8xi32, #tpu.memory_space<smem>>
    %132 = arith.index_cast %131 : i32 to index
    %c0_89 = arith.constant 0 : index
    %c0_90 = arith.constant 0 : index
    %133 = vector.load %arg2[%132, %c0_89, %c0_90] : memref<64x1x128xf32, #tpu.memory_space<vmem>>, vector<1x1x128xf32>
    %134 = vector.shape_cast %133 : vector<1x1x128xf32> to vector<1x128xf32>
    %c2_91 = arith.constant 2 : index
    %c7_92 = arith.constant 7 : index
    %135 = memref.load %arg1[%c2_91, %c7_92] : memref<8x8xi32, #tpu.memory_space<smem>>
    %136 = arith.index_cast %135 : i32 to index
    %c0_93 = arith.constant 0 : index
    %c0_94 = arith.constant 0 : index
    %137 = vector.load %arg2[%136, %c0_93, %c0_94] : memref<64x1x128xf32, #tpu.memory_space<vmem>>, vector<1x1x128xf32>
    %138 = vector.shape_cast %137 : vector<1x1x128xf32> to vector<1x128xf32>
    %139 = tpu.concatenate %110, %114, %118, %122, %126, %130, %134, %138 in 0 : vector<1x128xf32>, vector<1x128xf32>, vector<1x128xf32>, vector<1x128xf32>, vector<1x128xf32>, vector<1x128xf32>, vector<1x128xf32>, vector<1x128xf32> -> vector<8x128xf32>
    %140 = arith.truncf %106 : vector<8x32xf32> to vector<8x32xbf16>
    %cst_95 = arith.constant dense<0.000000e+00> : vector<8x128xf32>
    %141 = tpu.matmul %140, %0, %cst_95 {dimension_numbers = #tpu.dot_dimension_numbers<[1], [0], [0], [1], [0, 0, 1, 1], [], []>} : vector<8x32xbf16>, vector<32x128xbf16>, vector<8x128xf32> -> vector<8x128xf32>
    %142 = arith.addf %139, %141 : vector<8x128xf32>
    %143 = vector.extract_strided_slice %142 {offsets = [0, 0], sizes = [8, 96], strides = [1, 1]} : vector<8x128xf32> to vector<8x96xf32>
    %144 = arith.negf %143 : vector<8x96xf32>
    %145 = math.exp %144 : vector<8x96xf32>
    %cst_96 = arith.constant 1.000000e+00 : f32
    %146 = vector.broadcast %cst_96 : f32 to vector<8x96xf32>
    %147 = arith.addf %146, %145 : vector<8x96xf32>
    %148 = arith.divf %146, %147 : vector<8x96xf32>
    %149 = vector.extract_strided_slice %142 {offsets = [0, 96], sizes = [8, 32], strides = [1, 1]} : vector<8x128xf32> to vector<8x32xf32>
    %150 = math.tanh %149 : vector<8x32xf32>
    %151 = vector.extract_strided_slice %148 {offsets = [0, 0], sizes = [8, 32], strides = [1, 1]} : vector<8x96xf32> to vector<8x32xf32>
    %152 = vector.extract_strided_slice %148 {offsets = [0, 32], sizes = [8, 32], strides = [1, 1]} : vector<8x96xf32> to vector<8x32xf32>
    %153 = vector.extract_strided_slice %148 {offsets = [0, 64], sizes = [8, 32], strides = [1, 1]} : vector<8x96xf32> to vector<8x32xf32>
    %154 = arith.mulf %152, %104 : vector<8x32xf32>
    %155 = arith.mulf %151, %150 : vector<8x32xf32>
    %156 = arith.addf %154, %155 : vector<8x32xf32>
    %157 = math.tanh %156 : vector<8x32xf32>
    %158 = arith.mulf %153, %157 : vector<8x32xf32>
    %c3_97 = arith.constant 3 : index
    %c0_98 = arith.constant 0 : index
    %159 = memref.load %arg1[%c3_97, %c0_98] : memref<8x8xi32, #tpu.memory_space<smem>>
    %160 = arith.index_cast %159 : i32 to index
    %c0_99 = arith.constant 0 : index
    %c0_100 = arith.constant 0 : index
    %161 = vector.load %arg2[%160, %c0_99, %c0_100] : memref<64x1x128xf32, #tpu.memory_space<vmem>>, vector<1x1x128xf32>
    %162 = vector.shape_cast %161 : vector<1x1x128xf32> to vector<1x128xf32>
    %c3_101 = arith.constant 3 : index
    %c1_102 = arith.constant 1 : index
    %163 = memref.load %arg1[%c3_101, %c1_102] : memref<8x8xi32, #tpu.memory_space<smem>>
    %164 = arith.index_cast %163 : i32 to index
    %c0_103 = arith.constant 0 : index
    %c0_104 = arith.constant 0 : index
    %165 = vector.load %arg2[%164, %c0_103, %c0_104] : memref<64x1x128xf32, #tpu.memory_space<vmem>>, vector<1x1x128xf32>
    %166 = vector.shape_cast %165 : vector<1x1x128xf32> to vector<1x128xf32>
    %c3_105 = arith.constant 3 : index
    %c2_106 = arith.constant 2 : index
    %167 = memref.load %arg1[%c3_105, %c2_106] : memref<8x8xi32, #tpu.memory_space<smem>>
    %168 = arith.index_cast %167 : i32 to index
    %c0_107 = arith.constant 0 : index
    %c0_108 = arith.constant 0 : index
    %169 = vector.load %arg2[%168, %c0_107, %c0_108] : memref<64x1x128xf32, #tpu.memory_space<vmem>>, vector<1x1x128xf32>
    %170 = vector.shape_cast %169 : vector<1x1x128xf32> to vector<1x128xf32>
    %c3_109 = arith.constant 3 : index
    %c3_110 = arith.constant 3 : index
    %171 = memref.load %arg1[%c3_109, %c3_110] : memref<8x8xi32, #tpu.memory_space<smem>>
    %172 = arith.index_cast %171 : i32 to index
    %c0_111 = arith.constant 0 : index
    %c0_112 = arith.constant 0 : index
    %173 = vector.load %arg2[%172, %c0_111, %c0_112] : memref<64x1x128xf32, #tpu.memory_space<vmem>>, vector<1x1x128xf32>
    %174 = vector.shape_cast %173 : vector<1x1x128xf32> to vector<1x128xf32>
    %c3_113 = arith.constant 3 : index
    %c4_114 = arith.constant 4 : index
    %175 = memref.load %arg1[%c3_113, %c4_114] : memref<8x8xi32, #tpu.memory_space<smem>>
    %176 = arith.index_cast %175 : i32 to index
    %c0_115 = arith.constant 0 : index
    %c0_116 = arith.constant 0 : index
    %177 = vector.load %arg2[%176, %c0_115, %c0_116] : memref<64x1x128xf32, #tpu.memory_space<vmem>>, vector<1x1x128xf32>
    %178 = vector.shape_cast %177 : vector<1x1x128xf32> to vector<1x128xf32>
    %c3_117 = arith.constant 3 : index
    %c5_118 = arith.constant 5 : index
    %179 = memref.load %arg1[%c3_117, %c5_118] : memref<8x8xi32, #tpu.memory_space<smem>>
    %180 = arith.index_cast %179 : i32 to index
    %c0_119 = arith.constant 0 : index
    %c0_120 = arith.constant 0 : index
    %181 = vector.load %arg2[%180, %c0_119, %c0_120] : memref<64x1x128xf32, #tpu.memory_space<vmem>>, vector<1x1x128xf32>
    %182 = vector.shape_cast %181 : vector<1x1x128xf32> to vector<1x128xf32>
    %c3_121 = arith.constant 3 : index
    %c6_122 = arith.constant 6 : index
    %183 = memref.load %arg1[%c3_121, %c6_122] : memref<8x8xi32, #tpu.memory_space<smem>>
    %184 = arith.index_cast %183 : i32 to index
    %c0_123 = arith.constant 0 : index
    %c0_124 = arith.constant 0 : index
    %185 = vector.load %arg2[%184, %c0_123, %c0_124] : memref<64x1x128xf32, #tpu.memory_space<vmem>>, vector<1x1x128xf32>
    %186 = vector.shape_cast %185 : vector<1x1x128xf32> to vector<1x128xf32>
    %c3_125 = arith.constant 3 : index
    %c7_126 = arith.constant 7 : index
    %187 = memref.load %arg1[%c3_125, %c7_126] : memref<8x8xi32, #tpu.memory_space<smem>>
    %188 = arith.index_cast %187 : i32 to index
    %c0_127 = arith.constant 0 : index
    %c0_128 = arith.constant 0 : index
    %189 = vector.load %arg2[%188, %c0_127, %c0_128] : memref<64x1x128xf32, #tpu.memory_space<vmem>>, vector<1x1x128xf32>
    %190 = vector.shape_cast %189 : vector<1x1x128xf32> to vector<1x128xf32>
    %191 = tpu.concatenate %162, %166, %170, %174, %178, %182, %186, %190 in 0 : vector<1x128xf32>, vector<1x128xf32>, vector<1x128xf32>, vector<1x128xf32>, vector<1x128xf32>, vector<1x128xf32>, vector<1x128xf32>, vector<1x128xf32> -> vector<8x128xf32>
    %192 = arith.truncf %158 : vector<8x32xf32> to vector<8x32xbf16>
    %cst_129 = arith.constant dense<0.000000e+00> : vector<8x128xf32>
    %193 = tpu.matmul %192, %0, %cst_129 {dimension_numbers = #tpu.dot_dimension_numbers<[1], [0], [0], [1], [0, 0, 1, 1], [], []>} : vector<8x32xbf16>, vector<32x128xbf16>, vector<8x128xf32> -> vector<8x128xf32>
    %194 = arith.addf %191, %193 : vector<8x128xf32>
    %195 = vector.extract_strided_slice %194 {offsets = [0, 0], sizes = [8, 96], strides = [1, 1]} : vector<8x128xf32> to vector<8x96xf32>
    %196 = arith.negf %195 : vector<8x96xf32>
    %197 = math.exp %196 : vector<8x96xf32>
    %cst_130 = arith.constant 1.000000e+00 : f32
    %198 = vector.broadcast %cst_130 : f32 to vector<8x96xf32>
    %199 = arith.addf %198, %197 : vector<8x96xf32>
    %200 = arith.divf %198, %199 : vector<8x96xf32>
    %201 = vector.extract_strided_slice %194 {offsets = [0, 96], sizes = [8, 32], strides = [1, 1]} : vector<8x128xf32> to vector<8x32xf32>
    %202 = math.tanh %201 : vector<8x32xf32>
    %203 = vector.extract_strided_slice %200 {offsets = [0, 0], sizes = [8, 32], strides = [1, 1]} : vector<8x96xf32> to vector<8x32xf32>
    %204 = vector.extract_strided_slice %200 {offsets = [0, 32], sizes = [8, 32], strides = [1, 1]} : vector<8x96xf32> to vector<8x32xf32>
    %205 = vector.extract_strided_slice %200 {offsets = [0, 64], sizes = [8, 32], strides = [1, 1]} : vector<8x96xf32> to vector<8x32xf32>
    %206 = arith.mulf %204, %156 : vector<8x32xf32>
    %207 = arith.mulf %203, %202 : vector<8x32xf32>
    %208 = arith.addf %206, %207 : vector<8x32xf32>
    %209 = math.tanh %208 : vector<8x32xf32>
    %210 = arith.mulf %205, %209 : vector<8x32xf32>
    %c4_131 = arith.constant 4 : index
    %c0_132 = arith.constant 0 : index
    %211 = memref.load %arg1[%c4_131, %c0_132] : memref<8x8xi32, #tpu.memory_space<smem>>
    %212 = arith.index_cast %211 : i32 to index
    %c0_133 = arith.constant 0 : index
    %c0_134 = arith.constant 0 : index
    %213 = vector.load %arg2[%212, %c0_133, %c0_134] : memref<64x1x128xf32, #tpu.memory_space<vmem>>, vector<1x1x128xf32>
    %214 = vector.shape_cast %213 : vector<1x1x128xf32> to vector<1x128xf32>
    %c4_135 = arith.constant 4 : index
    %c1_136 = arith.constant 1 : index
    %215 = memref.load %arg1[%c4_135, %c1_136] : memref<8x8xi32, #tpu.memory_space<smem>>
    %216 = arith.index_cast %215 : i32 to index
    %c0_137 = arith.constant 0 : index
    %c0_138 = arith.constant 0 : index
    %217 = vector.load %arg2[%216, %c0_137, %c0_138] : memref<64x1x128xf32, #tpu.memory_space<vmem>>, vector<1x1x128xf32>
    %218 = vector.shape_cast %217 : vector<1x1x128xf32> to vector<1x128xf32>
    %c4_139 = arith.constant 4 : index
    %c2_140 = arith.constant 2 : index
    %219 = memref.load %arg1[%c4_139, %c2_140] : memref<8x8xi32, #tpu.memory_space<smem>>
    %220 = arith.index_cast %219 : i32 to index
    %c0_141 = arith.constant 0 : index
    %c0_142 = arith.constant 0 : index
    %221 = vector.load %arg2[%220, %c0_141, %c0_142] : memref<64x1x128xf32, #tpu.memory_space<vmem>>, vector<1x1x128xf32>
    %222 = vector.shape_cast %221 : vector<1x1x128xf32> to vector<1x128xf32>
    %c4_143 = arith.constant 4 : index
    %c3_144 = arith.constant 3 : index
    %223 = memref.load %arg1[%c4_143, %c3_144] : memref<8x8xi32, #tpu.memory_space<smem>>
    %224 = arith.index_cast %223 : i32 to index
    %c0_145 = arith.constant 0 : index
    %c0_146 = arith.constant 0 : index
    %225 = vector.load %arg2[%224, %c0_145, %c0_146] : memref<64x1x128xf32, #tpu.memory_space<vmem>>, vector<1x1x128xf32>
    %226 = vector.shape_cast %225 : vector<1x1x128xf32> to vector<1x128xf32>
    %c4_147 = arith.constant 4 : index
    %c4_148 = arith.constant 4 : index
    %227 = memref.load %arg1[%c4_147, %c4_148] : memref<8x8xi32, #tpu.memory_space<smem>>
    %228 = arith.index_cast %227 : i32 to index
    %c0_149 = arith.constant 0 : index
    %c0_150 = arith.constant 0 : index
    %229 = vector.load %arg2[%228, %c0_149, %c0_150] : memref<64x1x128xf32, #tpu.memory_space<vmem>>, vector<1x1x128xf32>
    %230 = vector.shape_cast %229 : vector<1x1x128xf32> to vector<1x128xf32>
    %c4_151 = arith.constant 4 : index
    %c5_152 = arith.constant 5 : index
    %231 = memref.load %arg1[%c4_151, %c5_152] : memref<8x8xi32, #tpu.memory_space<smem>>
    %232 = arith.index_cast %231 : i32 to index
    %c0_153 = arith.constant 0 : index
    %c0_154 = arith.constant 0 : index
    %233 = vector.load %arg2[%232, %c0_153, %c0_154] : memref<64x1x128xf32, #tpu.memory_space<vmem>>, vector<1x1x128xf32>
    %234 = vector.shape_cast %233 : vector<1x1x128xf32> to vector<1x128xf32>
    %c4_155 = arith.constant 4 : index
    %c6_156 = arith.constant 6 : index
    %235 = memref.load %arg1[%c4_155, %c6_156] : memref<8x8xi32, #tpu.memory_space<smem>>
    %236 = arith.index_cast %235 : i32 to index
    %c0_157 = arith.constant 0 : index
    %c0_158 = arith.constant 0 : index
    %237 = vector.load %arg2[%236, %c0_157, %c0_158] : memref<64x1x128xf32, #tpu.memory_space<vmem>>, vector<1x1x128xf32>
    %238 = vector.shape_cast %237 : vector<1x1x128xf32> to vector<1x128xf32>
    %c4_159 = arith.constant 4 : index
    %c7_160 = arith.constant 7 : index
    %239 = memref.load %arg1[%c4_159, %c7_160] : memref<8x8xi32, #tpu.memory_space<smem>>
    %240 = arith.index_cast %239 : i32 to index
    %c0_161 = arith.constant 0 : index
    %c0_162 = arith.constant 0 : index
    %241 = vector.load %arg2[%240, %c0_161, %c0_162] : memref<64x1x128xf32, #tpu.memory_space<vmem>>, vector<1x1x128xf32>
    %242 = vector.shape_cast %241 : vector<1x1x128xf32> to vector<1x128xf32>
    %243 = tpu.concatenate %214, %218, %222, %226, %230, %234, %238, %242 in 0 : vector<1x128xf32>, vector<1x128xf32>, vector<1x128xf32>, vector<1x128xf32>, vector<1x128xf32>, vector<1x128xf32>, vector<1x128xf32>, vector<1x128xf32> -> vector<8x128xf32>
    %244 = arith.truncf %210 : vector<8x32xf32> to vector<8x32xbf16>
    %cst_163 = arith.constant dense<0.000000e+00> : vector<8x128xf32>
    %245 = tpu.matmul %244, %0, %cst_163 {dimension_numbers = #tpu.dot_dimension_numbers<[1], [0], [0], [1], [0, 0, 1, 1], [], []>} : vector<8x32xbf16>, vector<32x128xbf16>, vector<8x128xf32> -> vector<8x128xf32>
    %246 = arith.addf %243, %245 : vector<8x128xf32>
    %247 = vector.extract_strided_slice %246 {offsets = [0, 0], sizes = [8, 96], strides = [1, 1]} : vector<8x128xf32> to vector<8x96xf32>
    %248 = arith.negf %247 : vector<8x96xf32>
    %249 = math.exp %248 : vector<8x96xf32>
    %cst_164 = arith.constant 1.000000e+00 : f32
    %250 = vector.broadcast %cst_164 : f32 to vector<8x96xf32>
    %251 = arith.addf %250, %249 : vector<8x96xf32>
    %252 = arith.divf %250, %251 : vector<8x96xf32>
    %253 = vector.extract_strided_slice %246 {offsets = [0, 96], sizes = [8, 32], strides = [1, 1]} : vector<8x128xf32> to vector<8x32xf32>
    %254 = math.tanh %253 : vector<8x32xf32>
    %255 = vector.extract_strided_slice %252 {offsets = [0, 0], sizes = [8, 32], strides = [1, 1]} : vector<8x96xf32> to vector<8x32xf32>
    %256 = vector.extract_strided_slice %252 {offsets = [0, 32], sizes = [8, 32], strides = [1, 1]} : vector<8x96xf32> to vector<8x32xf32>
    %257 = vector.extract_strided_slice %252 {offsets = [0, 64], sizes = [8, 32], strides = [1, 1]} : vector<8x96xf32> to vector<8x32xf32>
    %258 = arith.mulf %256, %208 : vector<8x32xf32>
    %259 = arith.mulf %255, %254 : vector<8x32xf32>
    %260 = arith.addf %258, %259 : vector<8x32xf32>
    %261 = math.tanh %260 : vector<8x32xf32>
    %262 = arith.mulf %257, %261 : vector<8x32xf32>
    %c5_165 = arith.constant 5 : index
    %c0_166 = arith.constant 0 : index
    %263 = memref.load %arg1[%c5_165, %c0_166] : memref<8x8xi32, #tpu.memory_space<smem>>
    %264 = arith.index_cast %263 : i32 to index
    %c0_167 = arith.constant 0 : index
    %c0_168 = arith.constant 0 : index
    %265 = vector.load %arg2[%264, %c0_167, %c0_168] : memref<64x1x128xf32, #tpu.memory_space<vmem>>, vector<1x1x128xf32>
    %266 = vector.shape_cast %265 : vector<1x1x128xf32> to vector<1x128xf32>
    %c5_169 = arith.constant 5 : index
    %c1_170 = arith.constant 1 : index
    %267 = memref.load %arg1[%c5_169, %c1_170] : memref<8x8xi32, #tpu.memory_space<smem>>
    %268 = arith.index_cast %267 : i32 to index
    %c0_171 = arith.constant 0 : index
    %c0_172 = arith.constant 0 : index
    %269 = vector.load %arg2[%268, %c0_171, %c0_172] : memref<64x1x128xf32, #tpu.memory_space<vmem>>, vector<1x1x128xf32>
    %270 = vector.shape_cast %269 : vector<1x1x128xf32> to vector<1x128xf32>
    %c5_173 = arith.constant 5 : index
    %c2_174 = arith.constant 2 : index
    %271 = memref.load %arg1[%c5_173, %c2_174] : memref<8x8xi32, #tpu.memory_space<smem>>
    %272 = arith.index_cast %271 : i32 to index
    %c0_175 = arith.constant 0 : index
    %c0_176 = arith.constant 0 : index
    %273 = vector.load %arg2[%272, %c0_175, %c0_176] : memref<64x1x128xf32, #tpu.memory_space<vmem>>, vector<1x1x128xf32>
    %274 = vector.shape_cast %273 : vector<1x1x128xf32> to vector<1x128xf32>
    %c5_177 = arith.constant 5 : index
    %c3_178 = arith.constant 3 : index
    %275 = memref.load %arg1[%c5_177, %c3_178] : memref<8x8xi32, #tpu.memory_space<smem>>
    %276 = arith.index_cast %275 : i32 to index
    %c0_179 = arith.constant 0 : index
    %c0_180 = arith.constant 0 : index
    %277 = vector.load %arg2[%276, %c0_179, %c0_180] : memref<64x1x128xf32, #tpu.memory_space<vmem>>, vector<1x1x128xf32>
    %278 = vector.shape_cast %277 : vector<1x1x128xf32> to vector<1x128xf32>
    %c5_181 = arith.constant 5 : index
    %c4_182 = arith.constant 4 : index
    %279 = memref.load %arg1[%c5_181, %c4_182] : memref<8x8xi32, #tpu.memory_space<smem>>
    %280 = arith.index_cast %279 : i32 to index
    %c0_183 = arith.constant 0 : index
    %c0_184 = arith.constant 0 : index
    %281 = vector.load %arg2[%280, %c0_183, %c0_184] : memref<64x1x128xf32, #tpu.memory_space<vmem>>, vector<1x1x128xf32>
    %282 = vector.shape_cast %281 : vector<1x1x128xf32> to vector<1x128xf32>
    %c5_185 = arith.constant 5 : index
    %c5_186 = arith.constant 5 : index
    %283 = memref.load %arg1[%c5_185, %c5_186] : memref<8x8xi32, #tpu.memory_space<smem>>
    %284 = arith.index_cast %283 : i32 to index
    %c0_187 = arith.constant 0 : index
    %c0_188 = arith.constant 0 : index
    %285 = vector.load %arg2[%284, %c0_187, %c0_188] : memref<64x1x128xf32, #tpu.memory_space<vmem>>, vector<1x1x128xf32>
    %286 = vector.shape_cast %285 : vector<1x1x128xf32> to vector<1x128xf32>
    %c5_189 = arith.constant 5 : index
    %c6_190 = arith.constant 6 : index
    %287 = memref.load %arg1[%c5_189, %c6_190] : memref<8x8xi32, #tpu.memory_space<smem>>
    %288 = arith.index_cast %287 : i32 to index
    %c0_191 = arith.constant 0 : index
    %c0_192 = arith.constant 0 : index
    %289 = vector.load %arg2[%288, %c0_191, %c0_192] : memref<64x1x128xf32, #tpu.memory_space<vmem>>, vector<1x1x128xf32>
    %290 = vector.shape_cast %289 : vector<1x1x128xf32> to vector<1x128xf32>
    %c5_193 = arith.constant 5 : index
    %c7_194 = arith.constant 7 : index
    %291 = memref.load %arg1[%c5_193, %c7_194] : memref<8x8xi32, #tpu.memory_space<smem>>
    %292 = arith.index_cast %291 : i32 to index
    %c0_195 = arith.constant 0 : index
    %c0_196 = arith.constant 0 : index
    %293 = vector.load %arg2[%292, %c0_195, %c0_196] : memref<64x1x128xf32, #tpu.memory_space<vmem>>, vector<1x1x128xf32>
    %294 = vector.shape_cast %293 : vector<1x1x128xf32> to vector<1x128xf32>
    %295 = tpu.concatenate %266, %270, %274, %278, %282, %286, %290, %294 in 0 : vector<1x128xf32>, vector<1x128xf32>, vector<1x128xf32>, vector<1x128xf32>, vector<1x128xf32>, vector<1x128xf32>, vector<1x128xf32>, vector<1x128xf32> -> vector<8x128xf32>
    %296 = arith.truncf %262 : vector<8x32xf32> to vector<8x32xbf16>
    %cst_197 = arith.constant dense<0.000000e+00> : vector<8x128xf32>
    %297 = tpu.matmul %296, %0, %cst_197 {dimension_numbers = #tpu.dot_dimension_numbers<[1], [0], [0], [1], [0, 0, 1, 1], [], []>} : vector<8x32xbf16>, vector<32x128xbf16>, vector<8x128xf32> -> vector<8x128xf32>
    %298 = arith.addf %295, %297 : vector<8x128xf32>
    %299 = vector.extract_strided_slice %298 {offsets = [0, 0], sizes = [8, 96], strides = [1, 1]} : vector<8x128xf32> to vector<8x96xf32>
    %300 = arith.negf %299 : vector<8x96xf32>
    %301 = math.exp %300 : vector<8x96xf32>
    %cst_198 = arith.constant 1.000000e+00 : f32
    %302 = vector.broadcast %cst_198 : f32 to vector<8x96xf32>
    %303 = arith.addf %302, %301 : vector<8x96xf32>
    %304 = arith.divf %302, %303 : vector<8x96xf32>
    %305 = vector.extract_strided_slice %298 {offsets = [0, 96], sizes = [8, 32], strides = [1, 1]} : vector<8x128xf32> to vector<8x32xf32>
    %306 = math.tanh %305 : vector<8x32xf32>
    %307 = vector.extract_strided_slice %304 {offsets = [0, 0], sizes = [8, 32], strides = [1, 1]} : vector<8x96xf32> to vector<8x32xf32>
    %308 = vector.extract_strided_slice %304 {offsets = [0, 32], sizes = [8, 32], strides = [1, 1]} : vector<8x96xf32> to vector<8x32xf32>
    %309 = vector.extract_strided_slice %304 {offsets = [0, 64], sizes = [8, 32], strides = [1, 1]} : vector<8x96xf32> to vector<8x32xf32>
    %310 = arith.mulf %308, %260 : vector<8x32xf32>
    %311 = arith.mulf %307, %306 : vector<8x32xf32>
    %312 = arith.addf %310, %311 : vector<8x32xf32>
    %313 = math.tanh %312 : vector<8x32xf32>
    %314 = arith.mulf %309, %313 : vector<8x32xf32>
    %c6_199 = arith.constant 6 : index
    %c0_200 = arith.constant 0 : index
    %315 = memref.load %arg1[%c6_199, %c0_200] : memref<8x8xi32, #tpu.memory_space<smem>>
    %316 = arith.index_cast %315 : i32 to index
    %c0_201 = arith.constant 0 : index
    %c0_202 = arith.constant 0 : index
    %317 = vector.load %arg2[%316, %c0_201, %c0_202] : memref<64x1x128xf32, #tpu.memory_space<vmem>>, vector<1x1x128xf32>
    %318 = vector.shape_cast %317 : vector<1x1x128xf32> to vector<1x128xf32>
    %c6_203 = arith.constant 6 : index
    %c1_204 = arith.constant 1 : index
    %319 = memref.load %arg1[%c6_203, %c1_204] : memref<8x8xi32, #tpu.memory_space<smem>>
    %320 = arith.index_cast %319 : i32 to index
    %c0_205 = arith.constant 0 : index
    %c0_206 = arith.constant 0 : index
    %321 = vector.load %arg2[%320, %c0_205, %c0_206] : memref<64x1x128xf32, #tpu.memory_space<vmem>>, vector<1x1x128xf32>
    %322 = vector.shape_cast %321 : vector<1x1x128xf32> to vector<1x128xf32>
    %c6_207 = arith.constant 6 : index
    %c2_208 = arith.constant 2 : index
    %323 = memref.load %arg1[%c6_207, %c2_208] : memref<8x8xi32, #tpu.memory_space<smem>>
    %324 = arith.index_cast %323 : i32 to index
    %c0_209 = arith.constant 0 : index
    %c0_210 = arith.constant 0 : index
    %325 = vector.load %arg2[%324, %c0_209, %c0_210] : memref<64x1x128xf32, #tpu.memory_space<vmem>>, vector<1x1x128xf32>
    %326 = vector.shape_cast %325 : vector<1x1x128xf32> to vector<1x128xf32>
    %c6_211 = arith.constant 6 : index
    %c3_212 = arith.constant 3 : index
    %327 = memref.load %arg1[%c6_211, %c3_212] : memref<8x8xi32, #tpu.memory_space<smem>>
    %328 = arith.index_cast %327 : i32 to index
    %c0_213 = arith.constant 0 : index
    %c0_214 = arith.constant 0 : index
    %329 = vector.load %arg2[%328, %c0_213, %c0_214] : memref<64x1x128xf32, #tpu.memory_space<vmem>>, vector<1x1x128xf32>
    %330 = vector.shape_cast %329 : vector<1x1x128xf32> to vector<1x128xf32>
    %c6_215 = arith.constant 6 : index
    %c4_216 = arith.constant 4 : index
    %331 = memref.load %arg1[%c6_215, %c4_216] : memref<8x8xi32, #tpu.memory_space<smem>>
    %332 = arith.index_cast %331 : i32 to index
    %c0_217 = arith.constant 0 : index
    %c0_218 = arith.constant 0 : index
    %333 = vector.load %arg2[%332, %c0_217, %c0_218] : memref<64x1x128xf32, #tpu.memory_space<vmem>>, vector<1x1x128xf32>
    %334 = vector.shape_cast %333 : vector<1x1x128xf32> to vector<1x128xf32>
    %c6_219 = arith.constant 6 : index
    %c5_220 = arith.constant 5 : index
    %335 = memref.load %arg1[%c6_219, %c5_220] : memref<8x8xi32, #tpu.memory_space<smem>>
    %336 = arith.index_cast %335 : i32 to index
    %c0_221 = arith.constant 0 : index
    %c0_222 = arith.constant 0 : index
    %337 = vector.load %arg2[%336, %c0_221, %c0_222] : memref<64x1x128xf32, #tpu.memory_space<vmem>>, vector<1x1x128xf32>
    %338 = vector.shape_cast %337 : vector<1x1x128xf32> to vector<1x128xf32>
    %c6_223 = arith.constant 6 : index
    %c6_224 = arith.constant 6 : index
    %339 = memref.load %arg1[%c6_223, %c6_224] : memref<8x8xi32, #tpu.memory_space<smem>>
    %340 = arith.index_cast %339 : i32 to index
    %c0_225 = arith.constant 0 : index
    %c0_226 = arith.constant 0 : index
    %341 = vector.load %arg2[%340, %c0_225, %c0_226] : memref<64x1x128xf32, #tpu.memory_space<vmem>>, vector<1x1x128xf32>
    %342 = vector.shape_cast %341 : vector<1x1x128xf32> to vector<1x128xf32>
    %c6_227 = arith.constant 6 : index
    %c7_228 = arith.constant 7 : index
    %343 = memref.load %arg1[%c6_227, %c7_228] : memref<8x8xi32, #tpu.memory_space<smem>>
    %344 = arith.index_cast %343 : i32 to index
    %c0_229 = arith.constant 0 : index
    %c0_230 = arith.constant 0 : index
    %345 = vector.load %arg2[%344, %c0_229, %c0_230] : memref<64x1x128xf32, #tpu.memory_space<vmem>>, vector<1x1x128xf32>
    %346 = vector.shape_cast %345 : vector<1x1x128xf32> to vector<1x128xf32>
    %347 = tpu.concatenate %318, %322, %326, %330, %334, %338, %342, %346 in 0 : vector<1x128xf32>, vector<1x128xf32>, vector<1x128xf32>, vector<1x128xf32>, vector<1x128xf32>, vector<1x128xf32>, vector<1x128xf32>, vector<1x128xf32> -> vector<8x128xf32>
    %348 = arith.truncf %314 : vector<8x32xf32> to vector<8x32xbf16>
    %cst_231 = arith.constant dense<0.000000e+00> : vector<8x128xf32>
    %349 = tpu.matmul %348, %0, %cst_231 {dimension_numbers = #tpu.dot_dimension_numbers<[1], [0], [0], [1], [0, 0, 1, 1], [], []>} : vector<8x32xbf16>, vector<32x128xbf16>, vector<8x128xf32> -> vector<8x128xf32>
    %350 = arith.addf %347, %349 : vector<8x128xf32>
    %351 = vector.extract_strided_slice %350 {offsets = [0, 0], sizes = [8, 96], strides = [1, 1]} : vector<8x128xf32> to vector<8x96xf32>
    %352 = arith.negf %351 : vector<8x96xf32>
    %353 = math.exp %352 : vector<8x96xf32>
    %cst_232 = arith.constant 1.000000e+00 : f32
    %354 = vector.broadcast %cst_232 : f32 to vector<8x96xf32>
    %355 = arith.addf %354, %353 : vector<8x96xf32>
    %356 = arith.divf %354, %355 : vector<8x96xf32>
    %357 = vector.extract_strided_slice %350 {offsets = [0, 96], sizes = [8, 32], strides = [1, 1]} : vector<8x128xf32> to vector<8x32xf32>
    %358 = math.tanh %357 : vector<8x32xf32>
    %359 = vector.extract_strided_slice %356 {offsets = [0, 0], sizes = [8, 32], strides = [1, 1]} : vector<8x96xf32> to vector<8x32xf32>
    %360 = vector.extract_strided_slice %356 {offsets = [0, 32], sizes = [8, 32], strides = [1, 1]} : vector<8x96xf32> to vector<8x32xf32>
    %361 = vector.extract_strided_slice %356 {offsets = [0, 64], sizes = [8, 32], strides = [1, 1]} : vector<8x96xf32> to vector<8x32xf32>
    %362 = arith.mulf %360, %312 : vector<8x32xf32>
    %363 = arith.mulf %359, %358 : vector<8x32xf32>
    %364 = arith.addf %362, %363 : vector<8x32xf32>
    %365 = math.tanh %364 : vector<8x32xf32>
    %366 = arith.mulf %361, %365 : vector<8x32xf32>
    %c7_233 = arith.constant 7 : index
    %c0_234 = arith.constant 0 : index
    %367 = memref.load %arg1[%c7_233, %c0_234] : memref<8x8xi32, #tpu.memory_space<smem>>
    %368 = arith.index_cast %367 : i32 to index
    %c0_235 = arith.constant 0 : index
    %c0_236 = arith.constant 0 : index
    %369 = vector.load %arg2[%368, %c0_235, %c0_236] : memref<64x1x128xf32, #tpu.memory_space<vmem>>, vector<1x1x128xf32>
    %370 = vector.shape_cast %369 : vector<1x1x128xf32> to vector<1x128xf32>
    %c7_237 = arith.constant 7 : index
    %c1_238 = arith.constant 1 : index
    %371 = memref.load %arg1[%c7_237, %c1_238] : memref<8x8xi32, #tpu.memory_space<smem>>
    %372 = arith.index_cast %371 : i32 to index
    %c0_239 = arith.constant 0 : index
    %c0_240 = arith.constant 0 : index
    %373 = vector.load %arg2[%372, %c0_239, %c0_240] : memref<64x1x128xf32, #tpu.memory_space<vmem>>, vector<1x1x128xf32>
    %374 = vector.shape_cast %373 : vector<1x1x128xf32> to vector<1x128xf32>
    %c7_241 = arith.constant 7 : index
    %c2_242 = arith.constant 2 : index
    %375 = memref.load %arg1[%c7_241, %c2_242] : memref<8x8xi32, #tpu.memory_space<smem>>
    %376 = arith.index_cast %375 : i32 to index
    %c0_243 = arith.constant 0 : index
    %c0_244 = arith.constant 0 : index
    %377 = vector.load %arg2[%376, %c0_243, %c0_244] : memref<64x1x128xf32, #tpu.memory_space<vmem>>, vector<1x1x128xf32>
    %378 = vector.shape_cast %377 : vector<1x1x128xf32> to vector<1x128xf32>
    %c7_245 = arith.constant 7 : index
    %c3_246 = arith.constant 3 : index
    %379 = memref.load %arg1[%c7_245, %c3_246] : memref<8x8xi32, #tpu.memory_space<smem>>
    %380 = arith.index_cast %379 : i32 to index
    %c0_247 = arith.constant 0 : index
    %c0_248 = arith.constant 0 : index
    %381 = vector.load %arg2[%380, %c0_247, %c0_248] : memref<64x1x128xf32, #tpu.memory_space<vmem>>, vector<1x1x128xf32>
    %382 = vector.shape_cast %381 : vector<1x1x128xf32> to vector<1x128xf32>
    %c7_249 = arith.constant 7 : index
    %c4_250 = arith.constant 4 : index
    %383 = memref.load %arg1[%c7_249, %c4_250] : memref<8x8xi32, #tpu.memory_space<smem>>
    %384 = arith.index_cast %383 : i32 to index
    %c0_251 = arith.constant 0 : index
    %c0_252 = arith.constant 0 : index
    %385 = vector.load %arg2[%384, %c0_251, %c0_252] : memref<64x1x128xf32, #tpu.memory_space<vmem>>, vector<1x1x128xf32>
    %386 = vector.shape_cast %385 : vector<1x1x128xf32> to vector<1x128xf32>
    %c7_253 = arith.constant 7 : index
    %c5_254 = arith.constant 5 : index
    %387 = memref.load %arg1[%c7_253, %c5_254] : memref<8x8xi32, #tpu.memory_space<smem>>
    %388 = arith.index_cast %387 : i32 to index
    %c0_255 = arith.constant 0 : index
    %c0_256 = arith.constant 0 : index
    %389 = vector.load %arg2[%388, %c0_255, %c0_256] : memref<64x1x128xf32, #tpu.memory_space<vmem>>, vector<1x1x128xf32>
    %390 = vector.shape_cast %389 : vector<1x1x128xf32> to vector<1x128xf32>
    %c7_257 = arith.constant 7 : index
    %c6_258 = arith.constant 6 : index
    %391 = memref.load %arg1[%c7_257, %c6_258] : memref<8x8xi32, #tpu.memory_space<smem>>
    %392 = arith.index_cast %391 : i32 to index
    %c0_259 = arith.constant 0 : index
    %c0_260 = arith.constant 0 : index
    %393 = vector.load %arg2[%392, %c0_259, %c0_260] : memref<64x1x128xf32, #tpu.memory_space<vmem>>, vector<1x1x128xf32>
    %394 = vector.shape_cast %393 : vector<1x1x128xf32> to vector<1x128xf32>
    %c7_261 = arith.constant 7 : index
    %c7_262 = arith.constant 7 : index
    %395 = memref.load %arg1[%c7_261, %c7_262] : memref<8x8xi32, #tpu.memory_space<smem>>
    %396 = arith.index_cast %395 : i32 to index
    %c0_263 = arith.constant 0 : index
    %c0_264 = arith.constant 0 : index
    %397 = vector.load %arg2[%396, %c0_263, %c0_264] : memref<64x1x128xf32, #tpu.memory_space<vmem>>, vector<1x1x128xf32>
    %398 = vector.shape_cast %397 : vector<1x1x128xf32> to vector<1x128xf32>
    %399 = tpu.concatenate %370, %374, %378, %382, %386, %390, %394, %398 in 0 : vector<1x128xf32>, vector<1x128xf32>, vector<1x128xf32>, vector<1x128xf32>, vector<1x128xf32>, vector<1x128xf32>, vector<1x128xf32>, vector<1x128xf32> -> vector<8x128xf32>
    %400 = arith.truncf %366 : vector<8x32xf32> to vector<8x32xbf16>
    %cst_265 = arith.constant dense<0.000000e+00> : vector<8x128xf32>
    %401 = tpu.matmul %400, %0, %cst_265 {dimension_numbers = #tpu.dot_dimension_numbers<[1], [0], [0], [1], [0, 0, 1, 1], [], []>} : vector<8x32xbf16>, vector<32x128xbf16>, vector<8x128xf32> -> vector<8x128xf32>
    %402 = arith.addf %399, %401 : vector<8x128xf32>
    %403 = vector.extract_strided_slice %402 {offsets = [0, 0], sizes = [8, 96], strides = [1, 1]} : vector<8x128xf32> to vector<8x96xf32>
    %404 = arith.negf %403 : vector<8x96xf32>
    %405 = math.exp %404 : vector<8x96xf32>
    %cst_266 = arith.constant 1.000000e+00 : f32
    %406 = vector.broadcast %cst_266 : f32 to vector<8x96xf32>
    %407 = arith.addf %406, %405 : vector<8x96xf32>
    %408 = arith.divf %406, %407 : vector<8x96xf32>
    %409 = vector.extract_strided_slice %402 {offsets = [0, 96], sizes = [8, 32], strides = [1, 1]} : vector<8x128xf32> to vector<8x32xf32>
    %410 = math.tanh %409 : vector<8x32xf32>
    %411 = vector.extract_strided_slice %408 {offsets = [0, 0], sizes = [8, 32], strides = [1, 1]} : vector<8x96xf32> to vector<8x32xf32>
    %412 = vector.extract_strided_slice %408 {offsets = [0, 32], sizes = [8, 32], strides = [1, 1]} : vector<8x96xf32> to vector<8x32xf32>
    %413 = vector.extract_strided_slice %408 {offsets = [0, 64], sizes = [8, 32], strides = [1, 1]} : vector<8x96xf32> to vector<8x32xf32>
    %414 = arith.mulf %412, %364 : vector<8x32xf32>
    %415 = arith.mulf %411, %410 : vector<8x32xf32>
    %416 = arith.addf %414, %415 : vector<8x32xf32>
    %417 = math.tanh %416 : vector<8x32xf32>
    %418 = arith.mulf %413, %417 : vector<8x32xf32>
    %419 = arith.truncf %418 : vector<8x32xf32> to vector<8x32xbf16>
    %c0_267 = arith.constant 0 : index
    %c0_268 = arith.constant 0 : index
    %420 = vector.load %arg4[%c0_267, %c0_268] : memref<32x4xbf16, #tpu.memory_space<vmem>>, vector<32x4xbf16>
    %cst_269 = arith.constant dense<0.000000e+00> : vector<8x4xf32>
    %421 = tpu.matmul %419, %420, %cst_269 {dimension_numbers = #tpu.dot_dimension_numbers<[1], [0], [0], [1], [0, 0, 1, 1], [], []>} : vector<8x32xbf16>, vector<32x4xbf16>, vector<8x4xf32> -> vector<8x4xf32>
    %c0_270 = arith.constant 0 : index
    %c0_271 = arith.constant 0 : index
    %422 = vector.load %arg5[%c0_270, %c0_271] : memref<1x4xf32, #tpu.memory_space<vmem>>, vector<1x4xf32>
    %423 = vector.broadcast %422 : vector<1x4xf32> to vector<8x4xf32>
    %424 = arith.addf %421, %423 : vector<8x4xf32>
    %425 = tpu.iota {dimensions = array<i32: 1>} : vector<8x4xi32>
    %cst_272 = arith.constant dense<0xFF800000> : vector<8xf32>
    %426 = vector.multi_reduction <maximumf>, %424, %cst_272 [1] : vector<8x4xf32> to vector<8xf32>
    %427 = vector.shape_cast %426 : vector<8xf32> to vector<8x1xf32>
    %428 = vector.broadcast %427 : vector<8x1xf32> to vector<8x4xf32>
    %429 = arith.cmpf oeq, %424, %428 : vector<8x4xf32>
    %c4_i32 = arith.constant 4 : i32
    %430 = vector.broadcast %c4_i32 : i32 to vector<8x4xi32>
    %431 = arith.select %429, %425, %430 : vector<8x4xi1>, vector<8x4xi32>
    %cst_273 = arith.constant dense<2147483647> : vector<8xi32>
    %432 = vector.multi_reduction <minsi>, %431, %cst_273 [1] : vector<8x4xi32> to vector<8xi32>
    %433 = vector.shape_cast %432 : vector<8xi32> to vector<8x1xi32>
    %c0_274 = arith.constant 0 : index
    %c0_275 = arith.constant 0 : index
    %434 = vector.load %arg6[%c0_274, %c0_275] : memref<8x1xi32, #tpu.memory_space<vmem>>, vector<8x1xi32>
    tpu.vector_store %arg6[%c0_274, %c0_275], %433 {strides = array<i32>} : memref<8x1xi32, #tpu.memory_space<vmem>>, vector<8x1xi32>,
    return
  }
  func.func @transform_0(%arg0: i32, %arg1: memref<8x8xi32, #tpu.memory_space<smem>>) -> (i32, i32, i32) {
    %c0_i32 = arith.constant 0 : i32
    %c0_i32_0 = arith.constant 0 : i32
    %c0_i32_1 = arith.constant 0 : i32
    %c0_i32_2 = arith.constant 0 : i32
    return %c0_i32, %c0_i32_0, %c0_i32_1 : i32, i32, i32
  }
  func.func @transform_1(%arg0: i32, %arg1: memref<8x8xi32, #tpu.memory_space<smem>>) -> (i32, i32) {
    %c0_i32 = arith.constant 0 : i32
    %c0_i32_0 = arith.constant 0 : i32
    %c0_i32_1 = arith.constant 0 : i32
    return %c0_i32, %c0_i32_0 : i32, i32
  }
  func.func @transform_2(%arg0: i32, %arg1: memref<8x8xi32, #tpu.memory_space<smem>>) -> (i32, i32) {
    %c0_i32 = arith.constant 0 : i32
    %c0_i32_0 = arith.constant 0 : i32
    %c0_i32_1 = arith.constant 0 : i32
    return %c0_i32, %c0_i32_0 : i32, i32
  }
  func.func @transform_3(%arg0: i32, %arg1: memref<8x8xi32, #tpu.memory_space<smem>>) -> (i32, i32) {
    %c0_i32 = arith.constant 0 : i32
    %c0_i32_0 = arith.constant 0 : i32
    %c0_i32_1 = arith.constant 0 : i32
    return %c0_i32, %c0_i32_0 : i32, i32
  }
  func.func @transform_4(%arg0: i32, %arg1: memref<8x8xi32, #tpu.memory_space<smem>>) -> (i32, i32) {
    %c0_i32 = arith.constant 0 : i32
    %c0_i32_0 = arith.constant 0 : i32
    %c0_i32_1 = arith.constant 0 : i32
    return %c0_i32, %c0_i32_0 : i32, i32
  }
}

</mosaic_0001>

<llo_original>
// kernel: simple_lstm_forward.1
$region0: #{simple_lstm_forward.1}
  #allocation0 [shape = 'u32[]', space=smem, size = 0x4, offset = 0x4, fixed_abs, tag = 'smem constant byte address 0x4 - core index']
  #allocation1 [shape = 'u32[72,128]{1,0:T(1,128)}', space=vmem, size = 0x9000, scoped, tag = 'internal scratch']
  #allocation2 [shape = 's32[1]{0}', space=sflag, size = 0x4, scoped, tag = 'scoped memory for simple_lstm_forward.1']
  #allocation3 [shape = 'u8[4096]{0}', space=smem, size = 0x1000, scoped, tag = 'prefetched SMEM operand 0']
  %s0 = inlined_call_operand.hbm [shape: s32[8,8], index: 0, kind: input, shape index: {}]
  %s1 = inlined_call_operand.hbm [shape: f32[64,1,128], index: 1, kind: input, shape index: {}]
  %s2 = inlined_call_operand.vmem [shape: bf16[32,128], index: 2, kind: input, shape index: {}]
  %s3 = inlined_call_operand.vmem [shape: bf16[32,4], index: 3, kind: input, shape index: {}]
  %s4 = inlined_call_operand.vmem [shape: f32[1,4], index: 4, kind: input, shape index: {}]
  %s5 = inlined_call_operand.vmem [shape: s32[8,1], index: 5, kind: output, shape index: {}]
  %s6 = sld [smem:[#allocation0]]
  $region30: #{simple_lstm_forward.1} parent=0
    _
  %s8 = ssub.s32 1, %s6
  %s9 = scalar_select 0, %s8, %s6
  %s11 = sshll.u32 %s0, 4
  %s12 = int_to_ptr.hbm [resolvable:$true] %s11
  %14 = dma.hbm_to_smem %s12, 128, [#allocation3], [#allocation2]
  %16 = dma.done [#allocation2], 128
  %17 = sfence
  $region1: #{simple_lstm_forward.1} parent=0
    #allocation4 [shape = 'u8[32768]{0}', space=vmem, size = 0x8000, scoped, tag = 'input window, operand 1, single buffered']
    #allocation5 [shape = 's32[1]{0}', space=sflag, size = 0x4, scoped, tag = 'scoped memory for simple_lstm_forward.1']
    %18 = vsyncpa [#allocation5], 0
    // Predicated region
    $region2: #{simple_lstm_forward.1} parent=1 // pred_check
      _
    $region3: #{simple_lstm_forward.1} parent=1 // pred_check_branch
      %20 = sbr.rel (0) target = $region5
    $region4: #{simple_lstm_forward.1} parent=1 // pred_region
      %22 = vsyncadd [#allocation5], 0
      %s23 = sshll.u32 %s1, 4
      %s24 = int_to_ptr.hbm [resolvable:$true] %s23
      %s25 = sshll.u32 [#allocation4], 4
      %s26 = int_to_ptr.vmem [resolvable:$true] %s25
      %31 = dma.hbm_to_vmem [thread:$0]  %s24, 1024, %s26, [#allocation5], 16, 16, 1
    $region5: #{simple_lstm_forward.1} parent=1 // pred_fallthru
      _
    // Predicated region
    $region6: #{simple_lstm_forward.1} parent=1 // pred_check
      _
    $region7: #{simple_lstm_forward.1} parent=1 // pred_check_branch
      %33 = sbr.rel (0) target = $region9
    $region8: #{simple_lstm_forward.1} parent=1 // pred_region
      _
    $region9: #{simple_lstm_forward.1} parent=1 // pred_fallthru
      _
    // Predicated region
    $region10: #{simple_lstm_forward.1} parent=1 // pred_check
      _
    $region11: #{simple_lstm_forward.1} parent=1 // pred_check_branch
      %35 = sbr.rel (0) target = $region13
    $region12: #{simple_lstm_forward.1} parent=1 // pred_region
      _
    $region13: #{simple_lstm_forward.1} parent=1 // pred_fallthru
      _
    // Predicated region
    $region14: #{simple_lstm_forward.1} parent=1 // pred_check
      _
    $region15: #{simple_lstm_forward.1} parent=1 // pred_check_branch
      %37 = sbr.rel (0) target = $region17
    $region16: #{simple_lstm_forward.1} parent=1 // pred_region
      _
    $region17: #{simple_lstm_forward.1} parent=1 // pred_fallthru
      _
    // Predicated region
    $region18: #{simple_lstm_forward.1} parent=1 // pred_check
      _
    $region19: #{simple_lstm_forward.1} parent=1 // pred_check_branch
      %39 = sbr.rel (0) target = $region21
    $region20: #{simple_lstm_forward.1} parent=1 // pred_region
      %41 = dma.done [#allocation5], 1024
    $region21: #{simple_lstm_forward.1} parent=1 // pred_fallthru
      _
    %v43 = vld [vmem:[%s2] sm:$0xf]
    %v44 = vld [vmem:[%s2 + $0x4] sm:$0xf]
    %v45 = vld [vmem:[%s2 + $0x8] sm:$0xf]
    %v46 = vld [vmem:[%s2 + $0xc] sm:$0xf]
    %s47 = sld [smem:[#allocation3]]
    %s48 = scalar_lea.vmem [#allocation4], %s47
    %v49 = vld [vmem:[%s48] sm:$0x1]
    %s50 = sld [smem:[#allocation3 + $0x1]]
    %s51 = scalar_lea.vmem [#allocation4], %s50
    %v52 = vld [vmem:[%s51] sm:$0x1]
    %s53 = sld [smem:[#allocation3 + $0x2]]
    %s54 = scalar_lea.vmem [#allocation4], %s53
    %v55 = vld [vmem:[%s54] sm:$0x1]
    %s56 = sld [smem:[#allocation3 + $0x3]]
    %s57 = scalar_lea.vmem [#allocation4], %s56
    %v58 = vld [vmem:[%s57] sm:$0x1]
    %s59 = sld [smem:[#allocation3 + $0x4]]
    %s60 = scalar_lea.vmem [#allocation4], %s59
    %v61 = vld [vmem:[%s60] sm:$0x1]
    %s62 = sld [smem:[#allocation3 + $0x5]]
    %s63 = scalar_lea.vmem [#allocation4], %s62
    %v64 = vld [vmem:[%s63] sm:$0x1]
    %s65 = sld [smem:[#allocation3 + $0x6]]
    %s66 = scalar_lea.vmem [#allocation4], %s65
    %v67 = vld [vmem:[%s66] sm:$0x1]
    %s68 = sld [smem:[#allocation3 + $0x7]]
    %s69 = scalar_lea.vmem [#allocation4], %s68
    %v70 = vld [vmem:[%s69] sm:$0x1]
    %v72 = vperm.slane %v52, 0
    %v75 = vperm.slane %v55, 0
    %v78 = vperm.slane %v58, 0
    %v81 = vperm.slane %v61, 0
    %v84 = vperm.slane %v64, 0
    %v87 = vperm.slane %v67, 0
    %v90 = vperm.slane %v70, 0
    %vm92 = vcmask 1040384
    %v93 = vsel %vm92, %v49, %v72
    %vm94 = vcmask 1041408
    %v95 = vsel %vm94, %v93, %v75
    %vm96 = vcmask 1042432
    %v97 = vsel %vm96, %v95, %v78
    %vm98 = vcmask 1043456
    %v99 = vsel %vm98, %v97, %v81
    %vm100 = vcmask 1044480
    %v101 = vsel %vm100, %v99, %v84
    %vm102 = vcmask 1045504
    %v103 = vsel %vm102, %v101, %v87
    %vm104 = vcmask 1046528
    %v105 = vsel %vm104, %v103, %v90
    %v110 = vunpack.c.l.b16 %v43
    %v111 = vunpack.c.l.b16 %v44
    %v112 = vunpack.c.l.b16 %v45
    %v113 = vunpack.c.l.b16 %v46
    %v114 = vpack.c.b16 %v111, %v110
    %v115 = vpack.c.b16 %v113, %v112
    %vm118 = vcmask 261120
    %v120 = vsel %vm118, 0, 0
    %122 = vmatpush.bf16.msra.mxu0 0
    %123 = vmatpush.bf16.msra.mxu0 0
    %124 = vmatpush.bf16.msra.mxu0 0
    %125 = vmatpush.bf16.msra.mxu0 0
    %126 = vmatpush.bf16.msra.mxu0 0
    %127 = vmatpush.bf16.msra.mxu0 0
    %128 = vmatpush.bf16.msra.mxu0 %v115
    %129 = vmatpush.bf16.msra.mxu0 %v114
    %130 = vmatmul.bf16.gmra.mxu0 %v120
    %v131 = vpop.f32.mrf.mxu0
    %v132 = vadd.f32 0.0, %v131
    %v133 = vpop.f32.mrf.mxu0
    %134 = vdwg.mxu0
    %v135 = vadd.f32 %v105, %v132
    %v136 = vxor.u32 %v135, 2147483648
    %v137 = vmul.f32 %v136, 1.442695
    %v138 = vpow.pop %v137
    %v139 = vadd.f32 %v138, 1.0
    %v140 = vrcp.pop %v139
    %v141 = vmul.f32 %v139, %v140
    %v142 = vsub.f32 1.0, %v141
    %v143 = vmul.f32 %v140, %v142
    %v144 = vadd.f32 %v140, %v143
    %vm145 = vweird.f32 %v139
    %vm146 = vweird.f32 %v140
    %vm147 = vmor %vm145, %vm146
    %v148 = vsel %vm147, %v140, %v144
    %v149 = vand.u32 2147483647, %v139
    %vm150 = vcmp.eq.f32.partialorder %v149, 8.507059e+37
    %v151 = vand.u32 %v139, 2147483648
    %v152 = vor.u32 1.1754944e-38, %v151
    %v153 = vsel %vm150, %v152, %v148
    %v154 = vmul.f32 1.0, %v153
    %v155 = vtanh.pop %v135
    %v156 = vmul.f32 %v154, 0.0
    %158 = vrot.lane.b32.xlu0 %v155, 32
    %v159 = vpop.permute.xlu0 %158
    %v161 = vmul.f32 %v154, %v159
    %163 = vrot.lane.b32.xlu0 %v161, 32
    %v164 = vpop.permute.xlu0 %163
    %v166 = vadd.f32 %v156, %v164
    %v167 = vtanh.pop %v166
    %169 = vrot.lane.b32.xlu0 %v167, 32
    %v170 = vpop.permute.xlu0 %169
    %v172 = vmul.f32 %v154, %v170
    %s173 = sld [smem:[#allocation3 + $0x80]]
    %s174 = scalar_lea.vmem [#allocation4], %s173
    %v175 = vld [vmem:[%s174] sm:$0x1]
    %s176 = sld [smem:[#allocation3 + $0x81]]
    %s177 = scalar_lea.vmem [#allocation4], %s176
    %v178 = vld [vmem:[%s177] sm:$0x1]
    %s179 = sld [smem:[#allocation3 + $0x82]]
    %s180 = scalar_lea.vmem [#allocation4], %s179
    %v181 = vld [vmem:[%s180] sm:$0x1]
    %s182 = sld [smem:[#allocation3 + $0x83]]
    %s183 = scalar_lea.vmem [#allocation4], %s182
    %v184 = vld [vmem:[%s183] sm:$0x1]
    %s185 = sld [smem:[#allocation3 + $0x84]]
    %s186 = scalar_lea.vmem [#allocation4], %s185
    %v187 = vld [vmem:[%s186] sm:$0x1]
    %s188 = sld [smem:[#allocation3 + $0x85]]
    %s189 = scalar_lea.vmem [#allocation4], %s188
    %v190 = vld [vmem:[%s189] sm:$0x1]
    %s191 = sld [smem:[#allocation3 + $0x86]]
    %s192 = scalar_lea.vmem [#allocation4], %s191
    %v193 = vld [vmem:[%s192] sm:$0x1]
    %s194 = sld [smem:[#allocation3 + $0x87]]
    %s195 = scalar_lea.vmem [#allocation4], %s194
    %v196 = vld [vmem:[%s195] sm:$0x1]
    %v198 = vperm.slane %v178, 0
    %v201 = vperm.slane %v181, 0
    %v204 = vperm.slane %v184, 0
    %v207 = vperm.slane %v187, 0
    %v210 = vperm.slane %v190, 0
    %v213 = vperm.slane %v193, 0
    %v216 = vperm.slane %v196, 0
    %v218 = vsel %vm92, %v175, %v198
    %v219 = vsel %vm94, %v218, %v201
    %v220 = vsel %vm96, %v219, %v204
    %v221 = vsel %vm98, %v220, %v207
    %v222 = vsel %vm100, %v221, %v210
    %v223 = vsel %vm102, %v222, %v213
    %v224 = vsel %vm104, %v223, %v216
    %v225 = vpack.c.bf16 %v172, %v172
    %227 = vrot.lane.b32.xlu0 %v225, 64
    %v228 = vpop.permute.xlu0 %227
    %v230 = vsel %vm118, %v228, 0
    %232 = vmatpush.bf16.msra.mxu0 0
    %233 = vmatpush.bf16.msra.mxu0 0
    %234 = vmatpush.bf16.msra.mxu0 0
    %235 = vmatpush.bf16.msra.mxu0 0
    %236 = vmatpush.bf16.msra.mxu0 0
    %237 = vmatpush.bf16.msra.mxu0 0
    %238 = vmatpush.bf16.msra.mxu0 %v115
    %239 = vmatpush.bf16.msra.mxu0 %v114
    %240 = vmatmul.bf16.gmra.mxu0 %v230
    %v241 = vpop.f32.mrf.mxu0
    %v242 = vadd.f32 0.0, %v241
    %v243 = vpop.f32.mrf.mxu0
    %244 = vdwg.mxu0
    %v245 = vadd.f32 %v224, %v242
    %v246 = vxor.u32 %v245, 2147483648
    %v247 = vmul.f32 %v246, 1.442695
    %v248 = vpow.pop %v247
    %v249 = vadd.f32 %v248, 1.0
    %v250 = vrcp.pop %v249
    %v251 = vmul.f32 %v249, %v250
    %v252 = vsub.f32 1.0, %v251
    %v253 = vmul.f32 %v250, %v252
    %v254 = vadd.f32 %v250, %v253
    %vm255 = vweird.f32 %v249
    %vm256 = vweird.f32 %v250
    %vm257 = vmor %vm255, %vm256
    %v258 = vsel %vm257, %v250, %v254
    %v259 = vand.u32 2147483647, %v249
    %vm260 = vcmp.eq.f32.partialorder %v259, 8.507059e+37
    %v261 = vand.u32 %v249, 2147483648
    %v262 = vor.u32 1.1754944e-38, %v261
    %v263 = vsel %vm260, %v262, %v258
    %v264 = vmul.f32 1.0, %v263
    %v265 = vtanh.pop %v245
    %v266 = vmul.f32 %v264, %v166
    %268 = vrot.lane.b32.xlu0 %v265, 32
    %v269 = vpop.permute.xlu0 %268
    %v271 = vmul.f32 %v264, %v269
    %273 = vrot.lane.b32.xlu0 %v271, 32
    %v274 = vpop.permute.xlu0 %273
    %v276 = vadd.f32 %v266, %v274
    %v277 = vtanh.pop %v276
    %279 = vrot.lane.b32.xlu0 %v277, 32
    %v280 = vpop.permute.xlu0 %279
    %v282 = vmul.f32 %v264, %v280
    %s283 = sld [smem:[#allocation3 + $0x100]]
    %s284 = scalar_lea.vmem [#allocation4], %s283
    %v285 = vld [vmem:[%s284] sm:$0x1]
    %s286 = sld [smem:[#allocation3 + $0x101]]
    %s287 = scalar_lea.vmem [#allocation4], %s286
    %v288 = vld [vmem:[%s287] sm:$0x1]
    %s289 = sld [smem:[#allocation3 + $0x102]]
    %s290 = scalar_lea.vmem [#allocation4], %s289
    %v291 = vld [vmem:[%s290] sm:$0x1]
    %s292 = sld [smem:[#allocation3 + $0x103]]
    %s293 = scalar_lea.vmem [#allocation4], %s292
    %v294 = vld [vmem:[%s293] sm:$0x1]
    %s295 = sld [smem:[#allocation3 + $0x104]]
    %s296 = scalar_lea.vmem [#allocation4], %s295
    %v297 = vld [vmem:[%s296] sm:$0x1]
    %s298 = sld [smem:[#allocation3 + $0x105]]
    %s299 = scalar_lea.vmem [#allocation4], %s298
    %v300 = vld [vmem:[%s299] sm:$0x1]
    %s301 = sld [smem:[#allocation3 + $0x106]]
    %s302 = scalar_lea.vmem [#allocation4], %s301
    %v303 = vld [vmem:[%s302] sm:$0x1]
    %s304 = sld [smem:[#allocation3 + $0x107]]
    %s305 = scalar_lea.vmem [#allocation4], %s304
    %v306 = vld [vmem:[%s305] sm:$0x1]
    %v308 = vperm.slane %v288, 0
    %v311 = vperm.slane %v291, 0
    %v314 = vperm.slane %v294, 0
    %v317 = vperm.slane %v297, 0
    %v320 = vperm.slane %v300, 0
    %v323 = vperm.slane %v303, 0
    %v326 = vperm.slane %v306, 0
    %v328 = vsel %vm92, %v285, %v308
    %v329 = vsel %vm94, %v328, %v311
    %v330 = vsel %vm96, %v329, %v314
    %v331 = vsel %vm98, %v330, %v317
    %v332 = vsel %vm100, %v331, %v320
    %v333 = vsel %vm102, %v332, %v323
    %v334 = vsel %vm104, %v333, %v326
    %v335 = vpack.c.bf16 %v282, %v282
    %337 = vrot.lane.b32.xlu0 %v335, 64
    %v338 = vpop.permute.xlu0 %337
    %v340 = vsel %vm118, %v338, 0
    %342 = vmatpush.bf16.msra.mxu0 0
    %343 = vmatpush.bf16.msra.mxu0 0
    %344 = vmatpush.bf16.msra.mxu0 0
    %345 = vmatpush.bf16.msra.mxu0 0
    %346 = vmatpush.bf16.msra.mxu0 0
    %347 = vmatpush.bf16.msra.mxu0 0
    %348 = vmatpush.bf16.msra.mxu0 %v115
    %349 = vmatpush.bf16.msra.mxu0 %v114
    %350 = vmatmul.bf16.gmra.mxu0 %v340
    %v351 = vpop.f32.mrf.mxu0
    %v352 = vadd.f32 0.0, %v351
    %v353 = vpop.f32.mrf.mxu0
    %354 = vdwg.mxu0
    %v355 = vadd.f32 %v334, %v352
    %v356 = vxor.u32 %v355, 2147483648
    %v357 = vmul.f32 %v356, 1.442695
    %v358 = vpow.pop %v357
    %v359 = vadd.f32 %v358, 1.0
    %v360 = vrcp.pop %v359
    %v361 = vmul.f32 %v359, %v360
    %v362 = vsub.f32 1.0, %v361
    %v363 = vmul.f32 %v360, %v362
    %v364 = vadd.f32 %v360, %v363
    %vm365 = vweird.f32 %v359
    %vm366 = vweird.f32 %v360
    %vm367 = vmor %vm365, %vm366
    %v368 = vsel %vm367, %v360, %v364
    %v369 = vand.u32 2147483647, %v359
    %vm370 = vcmp.eq.f32.partialorder %v369, 8.507059e+37
    %v371 = vand.u32 %v359, 2147483648
    %v372 = vor.u32 1.1754944e-38, %v371
    %v373 = vsel %vm370, %v372, %v368
    %v374 = vmul.f32 1.0, %v373
    %v375 = vtanh.pop %v355
    %v376 = vmul.f32 %v374, %v276
    %378 = vrot.lane.b32.xlu0 %v375, 32
    %v379 = vpop.permute.xlu0 %378
    %v381 = vmul.f32 %v374, %v379
    %383 = vrot.lane.b32.xlu0 %v381, 32
    %v384 = vpop.permute.xlu0 %383
    %v386 = vadd.f32 %v376, %v384
    %v387 = vtanh.pop %v386
    %389 = vrot.lane.b32.xlu0 %v387, 32
    %v390 = vpop.permute.xlu0 %389
    %v392 = vmul.f32 %v374, %v390
    %s393 = sld [smem:[#allocation3 + $0x180]]
    %s394 = scalar_lea.vmem [#allocation4], %s393
    %v395 = vld [vmem:[%s394] sm:$0x1]
    %s396 = sld [smem:[#allocation3 + $0x181]]
    %s397 = scalar_lea.vmem [#allocation4], %s396
    %v398 = vld [vmem:[%s397] sm:$0x1]
    %s399 = sld [smem:[#allocation3 + $0x182]]
    %s400 = scalar_lea.vmem [#allocation4], %s399
    %v401 = vld [vmem:[%s400] sm:$0x1]
    %s402 = sld [smem:[#allocation3 + $0x183]]
    %s403 = scalar_lea.vmem [#allocation4], %s402
    %v404 = vld [vmem:[%s403] sm:$0x1]
    %s405 = sld [smem:[#allocation3 + $0x184]]
    %s406 = scalar_lea.vmem [#allocation4], %s405
    %v407 = vld [vmem:[%s406] sm:$0x1]
    %s408 = sld [smem:[#allocation3 + $0x185]]
    %s409 = scalar_lea.vmem [#allocation4], %s408
    %v410 = vld [vmem:[%s409] sm:$0x1]
    %s411 = sld [smem:[#allocation3 + $0x186]]
    %s412 = scalar_lea.vmem [#allocation4], %s411
    %v413 = vld [vmem:[%s412] sm:$0x1]
    %s414 = sld [smem:[#allocation3 + $0x187]]
    %s415 = scalar_lea.vmem [#allocation4], %s414
    %v416 = vld [vmem:[%s415] sm:$0x1]
    %v418 = vperm.slane %v398, 0
    %v421 = vperm.slane %v401, 0
    %v424 = vperm.slane %v404, 0
    %v427 = vperm.slane %v407, 0
    %v430 = vperm.slane %v410, 0
    %v433 = vperm.slane %v413, 0
    %v436 = vperm.slane %v416, 0
    %v438 = vsel %vm92, %v395, %v418
    %v439 = vsel %vm94, %v438, %v421
    %v440 = vsel %vm96, %v439, %v424
    %v441 = vsel %vm98, %v440, %v427
    %v442 = vsel %vm100, %v441, %v430
    %v443 = vsel %vm102, %v442, %v433
    %v444 = vsel %vm104, %v443, %v436
    %v445 = vpack.c.bf16 %v392, %v392
    %447 = vrot.lane.b32.xlu0 %v445, 64
    %v448 = vpop.permute.xlu0 %447
    %v450 = vsel %vm118, %v448, 0
    %452 = vmatpush.bf16.msra.mxu0 0
    %453 = vmatpush.bf16.msra.mxu0 0
    %454 = vmatpush.bf16.msra.mxu0 0
    %455 = vmatpush.bf16.msra.mxu0 0
    %456 = vmatpush.bf16.msra.mxu0 0
    %457 = vmatpush.bf16.msra.mxu0 0
    %458 = vmatpush.bf16.msra.mxu0 %v115
    %459 = vmatpush.bf16.msra.mxu0 %v114
    %460 = vmatmul.bf16.gmra.mxu0 %v450
    %v461 = vpop.f32.mrf.mxu0
    %v462 = vadd.f32 0.0, %v461
    %v463 = vpop.f32.mrf.mxu0
    %464 = vdwg.mxu0
    %v465 = vadd.f32 %v444, %v462
    %v466 = vxor.u32 %v465, 2147483648
    %v467 = vmul.f32 %v466, 1.442695
    %v468 = vpow.pop %v467
    %v469 = vadd.f32 %v468, 1.0
    %v470 = vrcp.pop %v469
    %v471 = vmul.f32 %v469, %v470
    %v472 = vsub.f32 1.0, %v471
    %v473 = vmul.f32 %v470, %v472
    %v474 = vadd.f32 %v470, %v473
    %vm475 = vweird.f32 %v469
    %vm476 = vweird.f32 %v470
    %vm477 = vmor %vm475, %vm476
    %v478 = vsel %vm477, %v470, %v474
    %v479 = vand.u32 2147483647, %v469
    %vm480 = vcmp.eq.f32.partialorder %v479, 8.507059e+37
    %v481 = vand.u32 %v469, 2147483648
    %v482 = vor.u32 1.1754944e-38, %v481
    %v483 = vsel %vm480, %v482, %v478
    %v484 = vmul.f32 1.0, %v483
    %v485 = vtanh.pop %v465
    %v486 = vmul.f32 %v484, %v386
    %488 = vrot.lane.b32.xlu0 %v485, 32
    %v489 = vpop.permute.xlu0 %488
    %v491 = vmul.f32 %v484, %v489
    %493 = vrot.lane.b32.xlu0 %v491, 32
    %v494 = vpop.permute.xlu0 %493
    %v496 = vadd.f32 %v486, %v494
    %v497 = vtanh.pop %v496
    %499 = vrot.lane.b32.xlu0 %v497, 32
    %v500 = vpop.permute.xlu0 %499
    %v502 = vmul.f32 %v484, %v500
    %s503 = sld [smem:[#allocation3 + $0x200]]
    %s504 = scalar_lea.vmem [#allocation4], %s503
    %v505 = vld [vmem:[%s504] sm:$0x1]
    %s506 = sld [smem:[#allocation3 + $0x201]]
    %s507 = scalar_lea.vmem [#allocation4], %s506
    %v508 = vld [vmem:[%s507] sm:$0x1]
    %s509 = sld [smem:[#allocation3 + $0x202]]
    %s510 = scalar_lea.vmem [#allocation4], %s509
    %v511 = vld [vmem:[%s510] sm:$0x1]
    %s512 = sld [smem:[#allocation3 + $0x203]]
    %s513 = scalar_lea.vmem [#allocation4], %s512
    %v514 = vld [vmem:[%s513] sm:$0x1]
    %s515 = sld [smem:[#allocation3 + $0x204]]
    %s516 = scalar_lea.vmem [#allocation4], %s515
    %v517 = vld [vmem:[%s516] sm:$0x1]
    %s518 = sld [smem:[#allocation3 + $0x205]]
    %s519 = scalar_lea.vmem [#allocation4], %s518
    %v520 = vld [vmem:[%s519] sm:$0x1]
    %s521 = sld [smem:[#allocation3 + $0x206]]
    %s522 = scalar_lea.vmem [#allocation4], %s521
    %v523 = vld [vmem:[%s522] sm:$0x1]
    %s524 = sld [smem:[#allocation3 + $0x207]]
    %s525 = scalar_lea.vmem [#allocation4], %s524
    %v526 = vld [vmem:[%s525] sm:$0x1]
    %v528 = vperm.slane %v508, 0
    %v531 = vperm.slane %v511, 0
    %v534 = vperm.slane %v514, 0
    %v537 = vperm.slane %v517, 0
    %v540 = vperm.slane %v520, 0
    %v543 = vperm.slane %v523, 0
    %v546 = vperm.slane %v526, 0
    %v548 = vsel %vm92, %v505, %v528
    %v549 = vsel %vm94, %v548, %v531
    %v550 = vsel %vm96, %v549, %v534
    %v551 = vsel %vm98, %v550, %v537
    %v552 = vsel %vm100, %v551, %v540
    %v553 = vsel %vm102, %v552, %v543
    %v554 = vsel %vm104, %v553, %v546
    %v555 = vpack.c.bf16 %v502, %v502
    %557 = vrot.lane.b32.xlu0 %v555, 64
    %v558 = vpop.permute.xlu0 %557
    %v560 = vsel %vm118, %v558, 0
    %562 = vmatpush.bf16.msra.mxu0 0
    %563 = vmatpush.bf16.msra.mxu0 0
    %564 = vmatpush.bf16.msra.mxu0 0
    %565 = vmatpush.bf16.msra.mxu0 0
    %566 = vmatpush.bf16.msra.mxu0 0
    %567 = vmatpush.bf16.msra.mxu0 0
    %568 = vmatpush.bf16.msra.mxu0 %v115
    %569 = vmatpush.bf16.msra.mxu0 %v114
    %570 = vmatmul.bf16.gmra.mxu0 %v560
    %v571 = vpop.f32.mrf.mxu0
    %v572 = vadd.f32 0.0, %v571
    %v573 = vpop.f32.mrf.mxu0
    %574 = vdwg.mxu0
    %v575 = vadd.f32 %v554, %v572
    %v576 = vxor.u32 %v575, 2147483648
    %v577 = vmul.f32 %v576, 1.442695
    %v578 = vpow.pop %v577
    %v579 = vadd.f32 %v578, 1.0
    %v580 = vrcp.pop %v579
    %v581 = vmul.f32 %v579, %v580
    %v582 = vsub.f32 1.0, %v581
    %v583 = vmul.f32 %v580, %v582
    %v584 = vadd.f32 %v580, %v583
    %vm585 = vweird.f32 %v579
    %vm586 = vweird.f32 %v580
    %vm587 = vmor %vm585, %vm586
    %v588 = vsel %vm587, %v580, %v584
    %v589 = vand.u32 2147483647, %v579
    %vm590 = vcmp.eq.f32.partialorder %v589, 8.507059e+37
    %v591 = vand.u32 %v579, 2147483648
    %v592 = vor.u32 1.1754944e-38, %v591
    %v593 = vsel %vm590, %v592, %v588
    %v594 = vmul.f32 1.0, %v593
    %v595 = vtanh.pop %v575
    %v596 = vmul.f32 %v594, %v496
    %598 = vrot.lane.b32.xlu0 %v595, 32
    %v599 = vpop.permute.xlu0 %598
    %v601 = vmul.f32 %v594, %v599
    %603 = vrot.lane.b32.xlu0 %v601, 32
    %v604 = vpop.permute.xlu0 %603
    %v606 = vadd.f32 %v596, %v604
    %v607 = vtanh.pop %v606
    %609 = vrot.lane.b32.xlu0 %v607, 32
    %v610 = vpop.permute.xlu0 %609
    %v612 = vmul.f32 %v594, %v610
    %s613 = sld [smem:[#allocation3 + $0x280]]
    %s614 = scalar_lea.vmem [#allocation4], %s613
    %v615 = vld [vmem:[%s614] sm:$0x1]
    %s616 = sld [smem:[#allocation3 + $0x281]]
    %s617 = scalar_lea.vmem [#allocation4], %s616
    %v618 = vld [vmem:[%s617] sm:$0x1]
    %s619 = sld [smem:[#allocation3 + $0x282]]
    %s620 = scalar_lea.vmem [#allocation4], %s619
    %v621 = vld [vmem:[%s620] sm:$0x1]
    %s622 = sld [smem:[#allocation3 + $0x283]]
    %s623 = scalar_lea.vmem [#allocation4], %s622
    %v624 = vld [vmem:[%s623] sm:$0x1]
    %s625 = sld [smem:[#allocation3 + $0x284]]
    %s626 = scalar_lea.vmem [#allocation4], %s625
    %v627 = vld [vmem:[%s626] sm:$0x1]
    %s628 = sld [smem:[#allocation3 + $0x285]]
    %s629 = scalar_lea.vmem [#allocation4], %s628
    %v630 = vld [vmem:[%s629] sm:$0x1]
    %s631 = sld [smem:[#allocation3 + $0x286]]
    %s632 = scalar_lea.vmem [#allocation4], %s631
    %v633 = vld [vmem:[%s632] sm:$0x1]
    %s634 = sld [smem:[#allocation3 + $0x287]]
    %s635 = scalar_lea.vmem [#allocation4], %s634
    %v636 = vld [vmem:[%s635] sm:$0x1]
    %v638 = vperm.slane %v618, 0
    %v641 = vperm.slane %v621, 0
    %v644 = vperm.slane %v624, 0
    %v647 = vperm.slane %v627, 0
    %v650 = vperm.slane %v630, 0
    %v653 = vperm.slane %v633, 0
    %v656 = vperm.slane %v636, 0
    %v658 = vsel %vm92, %v615, %v638
    %v659 = vsel %vm94, %v658, %v641
    %v660 = vsel %vm96, %v659, %v644
    %v661 = vsel %vm98, %v660, %v647
    %v662 = vsel %vm100, %v661, %v650
    %v663 = vsel %vm102, %v662, %v653
    %v664 = vsel %vm104, %v663, %v656
    %v665 = vpack.c.bf16 %v612, %v612
    %667 = vrot.lane.b32.xlu0 %v665, 64
    %v668 = vpop.permute.xlu0 %667
    %v670 = vsel %vm118, %v668, 0
    %672 = vmatpush.bf16.msra.mxu0 0
    %673 = vmatpush.bf16.msra.mxu0 0
    %674 = vmatpush.bf16.msra.mxu0 0
    %675 = vmatpush.bf16.msra.mxu0 0
    %676 = vmatpush.bf16.msra.mxu0 0
    %677 = vmatpush.bf16.msra.mxu0 0
    %678 = vmatpush.bf16.msra.mxu0 %v115
    %679 = vmatpush.bf16.msra.mxu0 %v114
    %680 = vmatmul.bf16.gmra.mxu0 %v670
    %v681 = vpop.f32.mrf.mxu0
    %v682 = vadd.f32 0.0, %v681
    %v683 = vpop.f32.mrf.mxu0
    %684 = vdwg.mxu0
    %v685 = vadd.f32 %v664, %v682
    %v686 = vxor.u32 %v685, 2147483648
    %v687 = vmul.f32 %v686, 1.442695
    %v688 = vpow.pop %v687
    %v689 = vadd.f32 %v688, 1.0
    %v690 = vrcp.pop %v689
    %v691 = vmul.f32 %v689, %v690
    %v692 = vsub.f32 1.0, %v691
    %v693 = vmul.f32 %v690, %v692
    %v694 = vadd.f32 %v690, %v693
    %vm695 = vweird.f32 %v689
    %vm696 = vweird.f32 %v690
    %vm697 = vmor %vm695, %vm696
    %v698 = vsel %vm697, %v690, %v694
    %v699 = vand.u32 2147483647, %v689
    %vm700 = vcmp.eq.f32.partialorder %v699, 8.507059e+37
    %v701 = vand.u32 %v689, 2147483648
    %v702 = vor.u32 1.1754944e-38, %v701
    %v703 = vsel %vm700, %v702, %v698
    %v704 = vmul.f32 1.0, %v703
    %v705 = vtanh.pop %v685
    %v706 = vmul.f32 %v704, %v606
    %708 = vrot.lane.b32.xlu0 %v705, 32
    %v709 = vpop.permute.xlu0 %708
    %v711 = vmul.f32 %v704, %v709
    %713 = vrot.lane.b32.xlu0 %v711, 32
    %v714 = vpop.permute.xlu0 %713
    %v716 = vadd.f32 %v706, %v714
    %v717 = vtanh.pop %v716
    %719 = vrot.lane.b32.xlu0 %v717, 32
    %v720 = vpop.permute.xlu0 %719
    %v722 = vmul.f32 %v704, %v720
    %s723 = sld [smem:[#allocation3 + $0x300]]
    %s724 = scalar_lea.vmem [#allocation4], %s723
    %v725 = vld [vmem:[%s724] sm:$0x1]
    %s726 = sld [smem:[#allocation3 + $0x301]]
    %s727 = scalar_lea.vmem [#allocation4], %s726
    %v728 = vld [vmem:[%s727] sm:$0x1]
    %s729 = sld [smem:[#allocation3 + $0x302]]
    %s730 = scalar_lea.vmem [#allocation4], %s729
    %v731 = vld [vmem:[%s730] sm:$0x1]
    %s732 = sld [smem:[#allocation3 + $0x303]]
    %s733 = scalar_lea.vmem [#allocation4], %s732
    %v734 = vld [vmem:[%s733] sm:$0x1]
    %s735 = sld [smem:[#allocation3 + $0x304]]
    %s736 = scalar_lea.vmem [#allocation4], %s735
    %v737 = vld [vmem:[%s736] sm:$0x1]
    %s738 = sld [smem:[#allocation3 + $0x305]]
    %s739 = scalar_lea.vmem [#allocation4], %s738
    %v740 = vld [vmem:[%s739] sm:$0x1]
    %s741 = sld [smem:[#allocation3 + $0x306]]
    %s742 = scalar_lea.vmem [#allocation4], %s741
    %v743 = vld [vmem:[%s742] sm:$0x1]
    %s744 = sld [smem:[#allocation3 + $0x307]]
    %s745 = scalar_lea.vmem [#allocation4], %s744
    %v746 = vld [vmem:[%s745] sm:$0x1]
    %v748 = vperm.slane %v728, 0
    %v751 = vperm.slane %v731, 0
    %v754 = vperm.slane %v734, 0
    %v757 = vperm.slane %v737, 0
    %v760 = vperm.slane %v740, 0
    %v763 = vperm.slane %v743, 0
    %v766 = vperm.slane %v746, 0
    %v768 = vsel %vm92, %v725, %v748
    %v769 = vsel %vm94, %v768, %v751
    %v770 = vsel %vm96, %v769, %v754
    %v771 = vsel %vm98, %v770, %v757
    %v772 = vsel %vm100, %v771, %v760
    %v773 = vsel %vm102, %v772, %v763
    %v774 = vsel %vm104, %v773, %v766
    %v775 = vpack.c.bf16 %v722, %v722
    %777 = vrot.lane.b32.xlu0 %v775, 64
    %v778 = vpop.permute.xlu0 %777
    %v780 = vsel %vm118, %v778, 0
    %782 = vmatpush.bf16.msra.mxu0 0
    %783 = vmatpush.bf16.msra.mxu0 0
    %784 = vmatpush.bf16.msra.mxu0 0
    %785 = vmatpush.bf16.msra.mxu0 0
    %786 = vmatpush.bf16.msra.mxu0 0
    %787 = vmatpush.bf16.msra.mxu0 0
    %788 = vmatpush.bf16.msra.mxu0 %v115
    %789 = vmatpush.bf16.msra.mxu0 %v114
    %790 = vmatmul.bf16.gmra.mxu0 %v780
    %v791 = vpop.f32.mrf.mxu0
    %v792 = vadd.f32 0.0, %v791
    %v793 = vpop.f32.mrf.mxu0
    %794 = vdwg.mxu0
    %v795 = vadd.f32 %v774, %v792
    %v796 = vxor.u32 %v795, 2147483648
    %v797 = vmul.f32 %v796, 1.442695
    %v798 = vpow.pop %v797
    %v799 = vadd.f32 %v798, 1.0
    %v800 = vrcp.pop %v799
    %v801 = vmul.f32 %v799, %v800
    %v802 = vsub.f32 1.0, %v801
    %v803 = vmul.f32 %v800, %v802
    %v804 = vadd.f32 %v800, %v803
    %vm805 = vweird.f32 %v799
    %vm806 = vweird.f32 %v800
    %vm807 = vmor %vm805, %vm806
    %v808 = vsel %vm807, %v800, %v804
    %v809 = vand.u32 2147483647, %v799
    %vm810 = vcmp.eq.f32.partialorder %v809, 8.507059e+37
    %v811 = vand.u32 %v799, 2147483648
    %v812 = vor.u32 1.1754944e-38, %v811
    %v813 = vsel %vm810, %v812, %v808
    %v814 = vmul.f32 1.0, %v813
    %v815 = vtanh.pop %v795
    %v816 = vmul.f32 %v814, %v716
    %818 = vrot.lane.b32.xlu0 %v815, 32
    %v819 = vpop.permute.xlu0 %818
    %v821 = vmul.f32 %v814, %v819
    %823 = vrot.lane.b32.xlu0 %v821, 32
    %v824 = vpop.permute.xlu0 %823
    %v826 = vadd.f32 %v816, %v824
    %v827 = vtanh.pop %v826
    %829 = vrot.lane.b32.xlu0 %v827, 32
    %v830 = vpop.permute.xlu0 %829
    %v832 = vmul.f32 %v814, %v830
    %s833 = sld [smem:[#allocation3 + $0x380]]
    %s834 = scalar_lea.vmem [#allocation4], %s833
    %v835 = vld [vmem:[%s834] sm:$0x1]
    %s836 = sld [smem:[#allocation3 + $0x381]]
    %s837 = scalar_lea.vmem [#allocation4], %s836
    %v838 = vld [vmem:[%s837] sm:$0x1]
    %s839 = sld [smem:[#allocation3 + $0x382]]
    %s840 = scalar_lea.vmem [#allocation4], %s839
    %v841 = vld [vmem:[%s840] sm:$0x1]
    %s842 = sld [smem:[#allocation3 + $0x383]]
    %s843 = scalar_lea.vmem [#allocation4], %s842
    %v844 = vld [vmem:[%s843] sm:$0x1]
    %s845 = sld [smem:[#allocation3 + $0x384]]
    %s846 = scalar_lea.vmem [#allocation4], %s845
    %v847 = vld [vmem:[%s846] sm:$0x1]
    %s848 = sld [smem:[#allocation3 + $0x385]]
    %s849 = scalar_lea.vmem [#allocation4], %s848
    %v850 = vld [vmem:[%s849] sm:$0x1]
    %s851 = sld [smem:[#allocation3 + $0x386]]
    %s852 = scalar_lea.vmem [#allocation4], %s851
    %v853 = vld [vmem:[%s852] sm:$0x1]
    %s854 = sld [smem:[#allocation3 + $0x387]]
    %s855 = scalar_lea.vmem [#allocation4], %s854
    %v856 = vld [vmem:[%s855] sm:$0x1]
    %v858 = vperm.slane %v838, 0
    %v861 = vperm.slane %v841, 0
    %v864 = vperm.slane %v844, 0
    %v867 = vperm.slane %v847, 0
    %v870 = vperm.slane %v850, 0
    %v873 = vperm.slane %v853, 0
    %v876 = vperm.slane %v856, 0
    %v878 = vsel %vm92, %v835, %v858
    %v879 = vsel %vm94, %v878, %v861
    %v880 = vsel %vm96, %v879, %v864
    %v881 = vsel %vm98, %v880, %v867
    %v882 = vsel %vm100, %v881, %v870
    %v883 = vsel %vm102, %v882, %v873
    %v884 = vsel %vm104, %v883, %v876
    %v885 = vpack.c.bf16 %v832, %v832
    %887 = vrot.lane.b32.xlu0 %v885, 64
    %v888 = vpop.permute.xlu0 %887
    %v890 = vsel %vm118, %v888, 0
    %892 = vmatpush.bf16.msra.mxu0 0
    %893 = vmatpush.bf16.msra.mxu0 0
    %894 = vmatpush.bf16.msra.mxu0 0
    %895 = vmatpush.bf16.msra.mxu0 0
    %896 = vmatpush.bf16.msra.mxu0 0
    %897 = vmatpush.bf16.msra.mxu0 0
    %898 = vmatpush.bf16.msra.mxu0 %v115
    %899 = vmatpush.bf16.msra.mxu0 %v114
    %900 = vmatmul.bf16.gmra.mxu0 %v890
    %v901 = vpop.f32.mrf.mxu0
    %v902 = vadd.f32 0.0, %v901
    %v903 = vpop.f32.mrf.mxu0
    %904 = vdwg.mxu0
    %v905 = vadd.f32 %v884, %v902
    %v906 = vxor.u32 %v905, 2147483648
    %v907 = vmul.f32 %v906, 1.442695
    %v908 = vpow.pop %v907
    %v909 = vadd.f32 %v908, 1.0
    %v910 = vrcp.pop %v909
    %v911 = vmul.f32 %v909, %v910
    %v912 = vsub.f32 1.0, %v911
    %v913 = vmul.f32 %v910, %v912
    %v914 = vadd.f32 %v910, %v913
    %vm915 = vweird.f32 %v909
    %vm916 = vweird.f32 %v910
    %vm917 = vmor %vm915, %vm916
    %v918 = vsel %vm917, %v910, %v914
    %v919 = vand.u32 2147483647, %v909
    %vm920 = vcmp.eq.f32.partialorder %v919, 8.507059e+37
    %v921 = vand.u32 %v909, 2147483648
    %v922 = vor.u32 1.1754944e-38, %v921
    %v923 = vsel %vm920, %v922, %v918
    %v924 = vmul.f32 1.0, %v923
    %v925 = vtanh.pop %v905
    %v926 = vmul.f32 %v924, %v826
    %928 = vrot.lane.b32.xlu0 %v925, 32
    %v929 = vpop.permute.xlu0 %928
    %v931 = vmul.f32 %v924, %v929
    %933 = vrot.lane.b32.xlu0 %v931, 32
    %v934 = vpop.permute.xlu0 %933
    %v936 = vadd.f32 %v926, %v934
    %v937 = vtanh.pop %v936
    %939 = vrot.lane.b32.xlu0 %v937, 32
    %v940 = vpop.permute.xlu0 %939
    %v942 = vmul.f32 %v924, %v940
    %v943 = vpack.c.bf16 %v942, %v942
    %v944 = vld [vmem:[%s3] sm:$0xf]
    %v945 = vld [vmem:[%s3 + $0x4] sm:$0xf]
    %v946 = vld [vmem:[%s3 + $0x8] sm:$0xf]
    %v947 = vld [vmem:[%s3 + $0xc] sm:$0xf]
    %v948 = vld [vmem:[%s4] sm:$0x1]
    %v950 = vperm.slane %v948, 0
    %953 = vrot.lane.b32.xlu0 %v943, 64
    %v954 = vpop.permute.xlu0 %953
    %v959 = vunpack.c.l.b16 %v944
    %v960 = vunpack.c.l.b16 %v945
    %v961 = vunpack.c.l.b16 %v946
    %v962 = vunpack.c.l.b16 %v947
    %v963 = vpack.c.b16 %v960, %v959
    %v964 = vpack.c.b16 %v962, %v961
    %v968 = vsel %vm118, %v954, 0
    %970 = vmatpush.bf16.msra.mxu0 0
    %971 = vmatpush.bf16.msra.mxu0 0
    %972 = vmatpush.bf16.msra.mxu0 0
    %973 = vmatpush.bf16.msra.mxu0 0
    %974 = vmatpush.bf16.msra.mxu0 0
    %975 = vmatpush.bf16.msra.mxu0 0
    %976 = vmatpush.bf16.msra.mxu0 %v964
    %977 = vmatpush.bf16.msra.mxu0 %v963
    %978 = vmatmul.bf16.gmra.mxu0 %v968
    %v979 = vpop.f32.mrf.mxu0
    %v980 = vadd.f32 %v950, %v979
    %v981 = vpop.f32.mrf.mxu0
    %982 = vdwg.mxu0
    %v983 = vlaneseq
    %v984 = vand.u32 %v983, 127
    %vm985 = vcmask 31744
    %v986 = vsel %vm985, %v980, -inf
    %987 = vmax.xlane.f32.xlu0 %v986
    %v988 = vpop.xlane.xlu0 %987
    %vm989 = vcmp.eq.f32.partialorder %v980, %v988
    %v990 = vsel %vm989, %v984, 4
    %v991 = vsel %vm985, %v990, 2147483647
    %v992 = vand.u32 %v991, 65535
    %v993 = vshra.s32 %v991, 16
    %v994 = vcvt.s32.f32 %v992
    %v995 = vcvt.s32.f32 %v993
    %996 = vmin.xlane.f32.xlu0 %v995
    %v997 = vpop.xlane.xlu0 %996
    %vm998 = vcmp.eq.f32.partialorder %v995, %v997
    %v999 = vsel %vm998, %v994, inf
    %1000 = vmin.xlane.f32.xlu0 %v999
    %v1001 = vpop.xlane.xlu0 %1000
    %v1002 = vcvt.f32.s32 %v1001
    %v1003 = vcvt.f32.s32 %v997
    %v1004 = vshll.u32 %v1003, 16
    %v1005 = vadd.s32 %v1004, %v1002
    %vm1006 = vcmask 7168
    %1007 = vst.msk [vmem:[%s5] sm:$0xff] %vm1006, %v1005
    // Predicated region
    $region22: #{simple_lstm_forward.1} parent=1 // pred_check
      _
    $region23: #{simple_lstm_forward.1} parent=1 // pred_check_branch
      %1009 = sbr.rel (0) target = $region25
    $region24: #{simple_lstm_forward.1} parent=1 // pred_region
      _
    $region25: #{simple_lstm_forward.1} parent=1 // pred_fallthru
      _
    // Predicated region
    $region26: #{simple_lstm_forward.1} parent=1 // pred_check
      _
    $region27: #{simple_lstm_forward.1} parent=1 // pred_check_branch
      %1011 = sbr.rel (0) target = $region29
    $region28: #{simple_lstm_forward.1} parent=1 // pred_region
      _
    $region29: #{simple_lstm_forward.1} parent=1 // pred_fallthru
      _
    %1012 = vsyncpa [#allocation5], 1

</llo_original>
